<compile_context>
chip_gen: v7x
topology: tpu7x:2x2x1
jax: 0.10.0
libtpu: 0.0.40
codegen_flags: <defaults>
</compile_context>

<pallas_src>
import jax
import jax.numpy as jnp
from jax.experimental import pallas as pl
from jax.experimental.pallas import tpu as pltpu


# ----------------------------- Pallas kernel ---------------------------------
def basic_model_kernel(x_ref, adj_ref,
                       w_f_ref, b_f_ref, b_g_ref,
                       w_o_ref, b_o_ref,
                       w_tT_ref, b_t_ref,
                       out_ref):
    """Single-step kernel.

    x_ref:    (N, B*T, C)     node-major, batch folded into the matmul M dim
    adj_ref:  (N, N)
    w_f_ref:  (C, H)          fused  W_emb @ W_graph
    b_f_ref:  (1, H)   f32    fused  b_emb @ W_graph
    b_g_ref:  (1, H)   f32
    w_o_ref:  (H, D)
    b_o_ref:  (1, D)   f32
    w_tT_ref: (L, T)          W_time transposed
    b_t_ref:  (1, L*N*D) f32  time bias pre-tiled over (n, d)
    out_ref:  (B, L*N*D) f32  lane-dense rows (128 lanes at the demo size)
    """
    N, M, C = x_ref.shape
    B, LND = out_ref.shape
    L, T = w_tT_ref.shape
    D = w_o_ref.shape[1]
    cdt = x_ref.dtype                    # matmul-operand dtype (f32 or bf16)

    x = x_ref[...]
    adj = adj_ref[...]

    # Fused TrafficEmbedding + graph Linear: one (N*M, C) @ (C, H) contraction.
    u = jnp.einsum('nmc,ch->nmh', x, w_f_ref[...],
                   preferred_element_type=jnp.float32)
    u = (u + b_f_ref[...]).astype(cdt)                                   # (N, M, H)

    # Backbone adjacency aggregation: (N, N) @ (N, M*H), then bias + ReLU (f32).
    agg = jnp.einsum('pn,nmh->pmh', adj, u,
                     preferred_element_type=jnp.float32)
    h = jnp.maximum(agg + b_g_ref[...], 0.0).astype(cdt)                 # (N, M, H)

    # OutHead channel mix: hidden -> out_dim, ReLU (f32).
    o = jnp.einsum('pmh,hd->pmd', h, w_o_ref[...],
                   preferred_element_type=jnp.float32)
    o = jnp.maximum(o + b_o_ref[...], 0.0)                               # (N, B*T, D) f32

    # One deliberate relayout on the SMALLEST intermediate (D=2): bring T next to the
    # contraction so the time-mix is a clean batched (L, T) @ (T, N*D) dot whose result
    # is already the store layout.  Relayout is done in f32 before the optional bf16 cast.
    o2 = (jnp.transpose(o.reshape(N, B, T, D), (1, 2, 0, 3))
             .reshape(B, T, N * D)).astype(cdt)                          # (B, T, N*D)

    w_tT_b = jnp.broadcast_to(w_tT_ref[...], (B, L, T))
    y = jax.lax.dot_general(w_tT_b, o2,
                            dimension_numbers=(((2,), (1,)), ((0,), (0,))),
                            preferred_element_type=jnp.float32)          # (B, L, N*D)

    # Lane-dense store: (B, L*N*D) rows -> unmasked vst on the write path.
    out_ref[...] = (y.reshape(B, LND) + b_t_ref[...]).astype(out_ref.dtype)


# ------------------------------ wrapper ---------------------------------------
def basic_model_forward(x, adj, params, *, compute_dtype=jnp.float32):
    """x: [B, T, N, C] float32, adj: [N, N] float32 -> [B, out_len, N, out_dim] float32."""
    B, T, N, C = x.shape
    w_emb, b_emb, w_g, b_g, w_o, b_o, w_t, b_t = params
    H = w_g.shape[1]
    D = w_o.shape[1]
    L = w_t.shape[1]

    # Constant-fold the two channel linears (weight-only work, exact up to reassociation):
    #   adj_agg(x @ W_emb + b_emb) @ W_g + b_g == adj_agg(x @ (W_emb @ W_g) + b_emb @ W_g) + b_g
    w_fused = jnp.dot(w_emb, w_g)                       # (C, H)
    b_fused = jnp.dot(b_emb, w_g)                       # (1, H)
    w_tT = w_t.T                                        # (L, T)
    b_t_full = jnp.repeat(b_t[0], N * D)[None, :]       # (1, L*N*D), bias tiled over (n, d)

    # Node-major with batch folded under node: the adj step becomes one
    # (N, N) @ (N, B*T*H) contraction; channel matmuls see M = B*N*T rows.
    # TODO(synk): at realistic B*T*N sizes, drop this wrapper transpose (extra HBM pass)
    #             and read x in native layout via a tiled BlockSpec index_map.
    xt = jnp.transpose(x, (2, 0, 1, 3)).reshape(N, B * T, C)

    cdt = compute_dtype
    operands = (
        xt.astype(cdt),                     # x, node-major, batch folded
        adj.astype(cdt),                    # adjacency
        w_fused.astype(cdt),                # W_emb @ W_graph
        b_fused.astype(jnp.float32),        # b_emb @ W_graph
        b_g.astype(jnp.float32),            # b_graph
        w_o.astype(cdt),                    # W_out
        b_o.astype(jnp.float32),            # b_out
        w_tT.astype(cdt),                   # W_time^T
        b_t_full.astype(jnp.float32),       # b_time tiled to the store layout
    )

    flops = 2 * B * T * N * (C * H + N * H + H * D + D * L)
    bytes_accessed = (sum(op.size * op.dtype.itemsize for op in operands)
                      + B * L * N * D * 4)

    vmem_spec = pl.BlockSpec(memory_space=pltpu.MemorySpace.VMEM)

    out = pl.pallas_call(
        basic_model_kernel,
        out_shape=jax.ShapeDtypeStruct((B, L * N * D), jnp.float32),
        in_specs=[vmem_spec] * len(operands),
        out_specs=vmem_spec,
        cost_estimate=pl.CostEstimate(flops=flops, transcendentals=0,
                                      bytes_accessed=bytes_accessed),
    )(*operands)

    # Free metadata reshape (row-major split of the last dim): [B, L*N*D] -> [B, L, N, D]
    return out.reshape(B, L, N, D)


# --------------------------- reference (plain JAX) -----------------------------
def basic_model_reference(x, adj, params):
    w_emb, b_emb, w_g, b_g, w_o, b_o, w_t, b_t = params
    emb = jnp.einsum('btnc,ce->btne', x, w_emb) + b_emb[0]
    agg = jnp.einsum('mn,btne->btme', adj, emb)
    h = jax.nn.relu(jnp.einsum('btme,eh->btmh', agg, w_g) + b_g[0])
    o = jax.nn.relu(jnp.einsum('btnh,hd->btnd', h, w_o) + b_o[0])
    y = jnp.einsum('btnd,tl->blnd', o, w_t) + b_t[0][None, :, None, None]
    return y


# ------------------------------- main ------------------------------------------
if __name__ == "__main__":
    # config (small, consistent with the module's forward)
    B, in_len, num_node = 2, 8, 16
    traffic_dim, embed_dim, hidden_dim = 4, 32, 32
    out_dim, out_len = 2, 4
    # non-GAttention backbone path => final_len = in_len
    final_len = in_len

    key = jax.random.PRNGKey(0)
    ks = jax.random.split(key, 10)

    x = jax.random.normal(ks[0], (B, in_len, num_node, traffic_dim), jnp.float32)
    adj = jax.nn.softmax(jax.random.normal(ks[1], (num_node, num_node), jnp.float32), axis=-1)

    params = (
        0.1 * jax.random.normal(ks[2], (traffic_dim, embed_dim), jnp.float32),   # W_emb
        0.1 * jax.random.normal(ks[3], (1, embed_dim), jnp.float32),             # b_emb
        0.1 * jax.random.normal(ks[4], (embed_dim, hidden_dim), jnp.float32),    # W_graph
        0.1 * jax.random.normal(ks[5], (1, hidden_dim), jnp.float32),            # b_graph
        0.1 * jax.random.normal(ks[6], (hidden_dim, out_dim), jnp.float32),      # W_out
        0.1 * jax.random.normal(ks[7], (1, out_dim), jnp.float32),               # b_out
        0.1 * jax.random.normal(ks[8], (final_len, out_len), jnp.float32),       # W_time
        0.1 * jax.random.normal(ks[9], (1, out_len), jnp.float32),               # b_time
    )

    y_ref = basic_model_reference(x, adj, params)

    # f32 matmul operands: exact match to the reference.
    y = basic_model_forward(x, adj, params, compute_dtype=jnp.float32)
    y = jax.block_until_ready(y)
    assert y.shape == (B, out_len, num_node, out_dim), y.shape
    assert jnp.allclose(y, y_ref, atol=1e-4, rtol=1e-4), "f32 mismatch vs reference"

    # bf16 matmul operands (MXU-native, half the x/adj HBM bytes), f32 accumulation.
    y_bf16 = basic_model_forward(x, adj, params, compute_dtype=jnp.bfloat16)
    y_bf16 = jax.block_until_ready(y_bf16)
    assert jnp.allclose(y_bf16, y_ref, atol=2e-2, rtol=2e-2), "bf16 mismatch vs reference"

    print("KERNEL_OK")
</pallas_src>

<mosaic_0001>
module attributes {stable_mosaic.version = 11 : i64} {
  func.func @basic_model_kernel(%arg0: memref<16x16x4xf32, #tpu.memory_space<vmem>>, %arg1: memref<16x16xf32, #tpu.memory_space<vmem>>, %arg2: memref<4x32xf32, #tpu.memory_space<vmem>>, %arg3: memref<1x32xf32, #tpu.memory_space<vmem>>, %arg4: memref<1x32xf32, #tpu.memory_space<vmem>>, %arg5: memref<32x2xf32, #tpu.memory_space<vmem>>, %arg6: memref<1x2xf32, #tpu.memory_space<vmem>>, %arg7: memref<4x8xf32, #tpu.memory_space<vmem>>, %arg8: memref<1x128xf32, #tpu.memory_space<vmem>>, %arg9: memref<2x128xf32, #tpu.memory_space<vmem>>) attributes {dimension_semantics = [], scalar_prefetch = 0 : i64, scratch_operands = 0 : i64, tpu.core_type = #tpu.core_type<tc>} {
    %c0 = arith.constant 0 : index
    %c0_0 = arith.constant 0 : index
    %c0_1 = arith.constant 0 : index
    %0 = vector.load %arg0[%c0, %c0_0, %c0_1] : memref<16x16x4xf32, #tpu.memory_space<vmem>>, vector<16x16x4xf32>
    %c0_2 = arith.constant 0 : index
    %c0_3 = arith.constant 0 : index
    %1 = vector.load %arg1[%c0_2, %c0_3] : memref<16x16xf32, #tpu.memory_space<vmem>>, vector<16x16xf32>
    %c0_4 = arith.constant 0 : index
    %c0_5 = arith.constant 0 : index
    %2 = vector.load %arg2[%c0_4, %c0_5] : memref<4x32xf32, #tpu.memory_space<vmem>>, vector<4x32xf32>
    "tpu.trace_start"() <{level = 10 : i32, message = "nmc,ch->nmh"}> : () -> ()
    %cst = arith.constant dense<0.000000e+00> : vector<16x16x32xf32>
    %3 = tpu.matmul %0, %2, %cst {dimension_numbers = #tpu.dot_dimension_numbers<[2], [0], [0, 1], [1], [0, 0, 0, 1, 1, 1], [], []>} : vector<16x16x4xf32>, vector<4x32xf32>, vector<16x16x32xf32> -> vector<16x16x32xf32>
    "tpu.trace_stop"() : () -> ()
    %c0_6 = arith.constant 0 : index
    %c0_7 = arith.constant 0 : index
    %4 = vector.load %arg3[%c0_6, %c0_7] : memref<1x32xf32, #tpu.memory_space<vmem>>, vector<1x32xf32>
    %5 = vector.shape_cast %4 : vector<1x32xf32> to vector<1x1x32xf32>
    %6 = vector.broadcast %5 : vector<1x1x32xf32> to vector<16x16x32xf32>
    %7 = arith.addf %3, %6 : vector<16x16x32xf32>
    "tpu.trace_start"() <{level = 10 : i32, message = "pn,nmh->pmh"}> : () -> ()
    %cst_8 = arith.constant dense<0.000000e+00> : vector<16x16x32xf32>
    %8 = tpu.matmul %1, %7, %cst_8 {dimension_numbers = #tpu.dot_dimension_numbers<[1], [0], [0], [1, 2], [0, 0, 1, 1, 1, 2], [], []>} : vector<16x16xf32>, vector<16x16x32xf32>, vector<16x16x32xf32> -> vector<16x16x32xf32>
    "tpu.trace_stop"() : () -> ()
    %c0_9 = arith.constant 0 : index
    %c0_10 = arith.constant 0 : index
    %9 = vector.load %arg4[%c0_9, %c0_10] : memref<1x32xf32, #tpu.memory_space<vmem>>, vector<1x32xf32>
    %10 = vector.shape_cast %9 : vector<1x32xf32> to vector<1x1x32xf32>
    %11 = vector.broadcast %10 : vector<1x1x32xf32> to vector<16x16x32xf32>
    %12 = arith.addf %8, %11 : vector<16x16x32xf32>
    %cst_11 = arith.constant 0.000000e+00 : f32
    %13 = vector.broadcast %cst_11 : f32 to vector<16x16x32xf32>
    %14 = arith.maximumf %12, %13 : vector<16x16x32xf32>
    %c0_12 = arith.constant 0 : index
    %c0_13 = arith.constant 0 : index
    %15 = vector.load %arg5[%c0_12, %c0_13] : memref<32x2xf32, #tpu.memory_space<vmem>>, vector<32x2xf32>
    "tpu.trace_start"() <{level = 10 : i32, message = "pmh,hd->pmd"}> : () -> ()
    %cst_14 = arith.constant dense<0.000000e+00> : vector<16x16x2xf32>
    %16 = tpu.matmul %14, %15, %cst_14 {dimension_numbers = #tpu.dot_dimension_numbers<[2], [0], [0, 1], [1], [0, 0, 0, 1, 1, 1], [], []>} : vector<16x16x32xf32>, vector<32x2xf32>, vector<16x16x2xf32> -> vector<16x16x2xf32>
    "tpu.trace_stop"() : () -> ()
    %c0_15 = arith.constant 0 : index
    %c0_16 = arith.constant 0 : index
    %17 = vector.load %arg6[%c0_15, %c0_16] : memref<1x2xf32, #tpu.memory_space<vmem>>, vector<1x2xf32>
    %18 = vector.shape_cast %17 : vector<1x2xf32> to vector<1x1x2xf32>
    %19 = vector.broadcast %18 : vector<1x1x2xf32> to vector<16x16x2xf32>
    %20 = arith.addf %16, %19 : vector<16x16x2xf32>
    %cst_17 = arith.constant 0.000000e+00 : f32
    %21 = vector.broadcast %cst_17 : f32 to vector<16x16x2xf32>
    %22 = arith.maximumf %20, %21 : vector<16x16x2xf32>
    %23 = vector.shape_cast %22 : vector<16x16x2xf32> to vector<16x2x8x2xf32>
    %24 = tpu.transpose %23, [1, 2, 0, 3] : vector<16x2x8x2xf32> -> vector<2x8x16x2xf32>
    %25 = vector.shape_cast %24 : vector<2x8x16x2xf32> to vector<2x8x32xf32>
    %c0_18 = arith.constant 0 : index
    %c0_19 = arith.constant 0 : index
    %26 = vector.load %arg7[%c0_18, %c0_19] : memref<4x8xf32, #tpu.memory_space<vmem>>, vector<4x8xf32>
    %27 = vector.shape_cast %26 : vector<4x8xf32> to vector<1x4x8xf32>
    %28 = vector.broadcast %27 : vector<1x4x8xf32> to vector<2x4x8xf32>
    %cst_20 = arith.constant dense<0.000000e+00> : vector<2x4x32xf32>
    %29 = tpu.matmul %28, %25, %cst_20 {dimension_numbers = #tpu.dot_dimension_numbers<[2], [1], [1], [2], [0, 0, 0, 1, 1, 2], [0], [0]>} : vector<2x4x8xf32>, vector<2x8x32xf32>, vector<2x4x32xf32> -> vector<2x4x32xf32>
    %30 = vector.shape_cast %29 : vector<2x4x32xf32> to vector<2x128xf32>
    %c0_21 = arith.constant 0 : index
    %c0_22 = arith.constant 0 : index
    %31 = vector.load %arg8[%c0_21, %c0_22] : memref<1x128xf32, #tpu.memory_space<vmem>>, vector<1x128xf32>
    %32 = vector.broadcast %31 : vector<1x128xf32> to vector<2x128xf32>
    %33 = arith.addf %30, %32 : vector<2x128xf32>
    %c0_23 = arith.constant 0 : index
    %c0_24 = arith.constant 0 : index
    %34 = vector.load %arg9[%c0_23, %c0_24] : memref<2x128xf32, #tpu.memory_space<vmem>>, vector<2x128xf32>
    tpu.vector_store %arg9[%c0_23, %c0_24], %33 {strides = array<i32>} : memref<2x128xf32, #tpu.memory_space<vmem>>, vector<2x128xf32>,
    return
  }
}

</mosaic_0001>

<llo_original>
// kernel: tpu_custom_call.1
$region0: #{tpu_custom_call.1}
  #allocation0 [shape = 'u32[]', space=smem, size = 0x4, offset = 0x4, fixed_abs, tag = 'smem constant byte address 0x4 - core index']
  #allocation1 [shape = 'u32[144,128]{1,0:T(1,128)}', space=vmem, size = 0x12000, scoped, tag = 'internal scratch']
  %s0 = inlined_call_operand.vmem [shape: f32[16,16,4], index: 0, kind: input, shape index: {}]
  %s1 = inlined_call_operand.vmem [shape: f32[16,16], index: 1, kind: input, shape index: {}]
  %s2 = inlined_call_operand.vmem [shape: f32[4,32], index: 2, kind: input, shape index: {}]
  %s3 = inlined_call_operand.vmem [shape: f32[1,32], index: 3, kind: input, shape index: {}]
  %s4 = inlined_call_operand.vmem [shape: f32[1,32], index: 4, kind: input, shape index: {}]
  %s5 = inlined_call_operand.vmem [shape: f32[32,2], index: 5, kind: input, shape index: {}]
  %s6 = inlined_call_operand.vmem [shape: f32[1,2], index: 6, kind: input, shape index: {}]
  %s7 = inlined_call_operand.vmem [shape: f32[4,8], index: 7, kind: input, shape index: {}]
  %s8 = inlined_call_operand.vmem [shape: f32[1,128], index: 8, kind: input, shape index: {}]
  %s9 = inlined_call_operand.hbm [shape: f32[2,128], index: 9, kind: output, shape index: {}]
  %s10 = sld [smem:[#allocation0]]
  $region46: #{tpu_custom_call.1} parent=0
    _
  %s12 = ssub.s32 1, %s10
  %s13 = scalar_select 0, %s12, %s10
  $region1: #{tpu_custom_call.1} parent=0
    #allocation2 [shape = 'u8[1024]{0}', space=vmem, size = 0x400, scoped, tag = 'output window, operand 0, single buffered']
    #allocation3 [shape = 's32[1]{0}', space=sflag, size = 0x4, scoped, tag = 'scoped memory for tpu_custom_call.1']
    %14 = vsyncpa [#allocation3], 0
    // Predicated region
    $region2: #{tpu_custom_call.1} parent=1 // pred_check
      _
    $region3: #{tpu_custom_call.1} parent=1 // pred_check_branch
      %16 = sbr.rel (0) target = $region5
    $region4: #{tpu_custom_call.1} parent=1 // pred_region
      _
    $region5: #{tpu_custom_call.1} parent=1 // pred_fallthru
      _
    // Predicated region
    $region6: #{tpu_custom_call.1} parent=1 // pred_check
      _
    $region7: #{tpu_custom_call.1} parent=1 // pred_check_branch
      %18 = sbr.rel (0) target = $region9
    $region8: #{tpu_custom_call.1} parent=1 // pred_region
      _
    $region9: #{tpu_custom_call.1} parent=1 // pred_fallthru
      _
    // Predicated region
    $region10: #{tpu_custom_call.1} parent=1 // pred_check
      _
    $region11: #{tpu_custom_call.1} parent=1 // pred_check_branch
      %20 = sbr.rel (0) target = $region13
    $region12: #{tpu_custom_call.1} parent=1 // pred_region
      _
    $region13: #{tpu_custom_call.1} parent=1 // pred_fallthru
      _
    // Predicated region
    $region14: #{tpu_custom_call.1} parent=1 // pred_check
      _
    $region15: #{tpu_custom_call.1} parent=1 // pred_check_branch
      %22 = sbr.rel (0) target = $region17
    $region16: #{tpu_custom_call.1} parent=1 // pred_region
      _
    $region17: #{tpu_custom_call.1} parent=1 // pred_fallthru
      _
    // Predicated region
    $region18: #{tpu_custom_call.1} parent=1 // pred_check
      _
    $region19: #{tpu_custom_call.1} parent=1 // pred_check_branch
      %24 = sbr.rel (0) target = $region21
    $region20: #{tpu_custom_call.1} parent=1 // pred_region
      _
    $region21: #{tpu_custom_call.1} parent=1 // pred_fallthru
      _
    // Predicated region
    $region22: #{tpu_custom_call.1} parent=1 // pred_check
      _
    $region23: #{tpu_custom_call.1} parent=1 // pred_check_branch
      %26 = sbr.rel (0) target = $region25
    $region24: #{tpu_custom_call.1} parent=1 // pred_region
      _
    $region25: #{tpu_custom_call.1} parent=1 // pred_fallthru
      _
    // Predicated region
    $region26: #{tpu_custom_call.1} parent=1 // pred_check
      _
    $region27: #{tpu_custom_call.1} parent=1 // pred_check_branch
      %28 = sbr.rel (0) target = $region29
    $region28: #{tpu_custom_call.1} parent=1 // pred_region
      _
    $region29: #{tpu_custom_call.1} parent=1 // pred_fallthru
      _
    // Predicated region
    $region30: #{tpu_custom_call.1} parent=1 // pred_check
      _
    $region31: #{tpu_custom_call.1} parent=1 // pred_check_branch
      %30 = sbr.rel (0) target = $region33
    $region32: #{tpu_custom_call.1} parent=1 // pred_region
      _
    $region33: #{tpu_custom_call.1} parent=1 // pred_fallthru
      _
    // Predicated region
    $region34: #{tpu_custom_call.1} parent=1 // pred_check
      _
    $region35: #{tpu_custom_call.1} parent=1 // pred_check_branch
      %32 = sbr.rel (0) target = $region37
    $region36: #{tpu_custom_call.1} parent=1 // pred_region
      _
    $region37: #{tpu_custom_call.1} parent=1 // pred_fallthru
      _
    %v33 = vld [vmem:[%s0] sm:$0xff]
    %v34 = vld [vmem:[%s0 + $0x8] sm:$0xff]
    %v35 = vld [vmem:[%s0 + $0x10] sm:$0xff]
    %v36 = vld [vmem:[%s0 + $0x18] sm:$0xff]
    %v37 = vld [vmem:[%s0 + $0x20] sm:$0xff]
    %v38 = vld [vmem:[%s0 + $0x28] sm:$0xff]
    %v39 = vld [vmem:[%s0 + $0x30] sm:$0xff]
    %v40 = vld [vmem:[%s0 + $0x38] sm:$0xff]
    %v41 = vld [vmem:[%s0 + $0x40] sm:$0xff]
    %v42 = vld [vmem:[%s0 + $0x48] sm:$0xff]
    %v43 = vld [vmem:[%s0 + $0x50] sm:$0xff]
    %v44 = vld [vmem:[%s0 + $0x58] sm:$0xff]
    %v45 = vld [vmem:[%s0 + $0x60] sm:$0xff]
    %v46 = vld [vmem:[%s0 + $0x68] sm:$0xff]
    %v47 = vld [vmem:[%s0 + $0x70] sm:$0xff]
    %v48 = vld [vmem:[%s0 + $0x78] sm:$0xff]
    %v49 = vld [vmem:[%s0 + $0x80] sm:$0xff]
    %v50 = vld [vmem:[%s0 + $0x88] sm:$0xff]
    %v51 = vld [vmem:[%s0 + $0x90] sm:$0xff]
    %v52 = vld [vmem:[%s0 + $0x98] sm:$0xff]
    %v53 = vld [vmem:[%s0 + $0xa0] sm:$0xff]
    %v54 = vld [vmem:[%s0 + $0xa8] sm:$0xff]
    %v55 = vld [vmem:[%s0 + $0xb0] sm:$0xff]
    %v56 = vld [vmem:[%s0 + $0xb8] sm:$0xff]
    %v57 = vld [vmem:[%s0 + $0xc0] sm:$0xff]
    %v58 = vld [vmem:[%s0 + $0xc8] sm:$0xff]
    %v59 = vld [vmem:[%s0 + $0xd0] sm:$0xff]
    %v60 = vld [vmem:[%s0 + $0xd8] sm:$0xff]
    %v61 = vld [vmem:[%s0 + $0xe0] sm:$0xff]
    %v62 = vld [vmem:[%s0 + $0xe8] sm:$0xff]
    %v63 = vld [vmem:[%s0 + $0xf0] sm:$0xff]
    %v64 = vld [vmem:[%s0 + $0xf8] sm:$0xff]
    %v65 = vld [vmem:[%s1] sm:$0xff]
    %v66 = vld [vmem:[%s1 + $0x8] sm:$0xff]
    %v67 = vld [vmem:[%s2] sm:$0xf]
    %v68 = vld [vmem:[%s3] sm:$0x1]
    %v70 = vlaneseq
    %v71 = vshrl.u32 %v70, 7
    %v72 = vsub.s32 0, %v71
    %v73 = vrot.slane %v68, %v72
    %vm75 = vcmask 31744
    %v77 = vsel %vm75, %v33, 0
    %v80 = vsel %vm75, %v34, 0
    %v83 = vsel %vm75, %v35, 0
    %v86 = vsel %vm75, %v36, 0
    %v89 = vsel %vm75, %v37, 0
    %v92 = vsel %vm75, %v38, 0
    %v95 = vsel %vm75, %v39, 0
    %v98 = vsel %vm75, %v40, 0
    %v101 = vsel %vm75, %v41, 0
    %v104 = vsel %vm75, %v42, 0
    %v107 = vsel %vm75, %v43, 0
    %v110 = vsel %vm75, %v44, 0
    %v113 = vsel %vm75, %v45, 0
    %v116 = vsel %vm75, %v46, 0
    %v119 = vsel %vm75, %v47, 0
    %v122 = vsel %vm75, %v48, 0
    %v125 = vsel %vm75, %v49, 0
    %v128 = vsel %vm75, %v50, 0
    %v131 = vsel %vm75, %v51, 0
    %v134 = vsel %vm75, %v52, 0
    %v137 = vsel %vm75, %v53, 0
    %v140 = vsel %vm75, %v54, 0
    %v143 = vsel %vm75, %v55, 0
    %v146 = vsel %vm75, %v56, 0
    %v149 = vsel %vm75, %v57, 0
    %v152 = vsel %vm75, %v58, 0
    %v155 = vsel %vm75, %v59, 0
    %v158 = vsel %vm75, %v60, 0
    %v161 = vsel %vm75, %v61, 0
    %v164 = vsel %vm75, %v62, 0
    %v167 = vsel %vm75, %v63, 0
    %v170 = vsel %vm75, %v64, 0
    %vm172 = vcmask 1043456
    %v174 = vsel %vm172, %v67, 0
    %176 = vmatprep.subr.mxu0 0.0
    %177 = vmatpush1.msra.mxu0 %v174
    %178 = vmatprep.subr.mxu0 0.0
    %179 = vmatpush1.msra.mxu0 0.0
    %180 = vmatprep.subr.mxu0 0.0
    %181 = vmatpush1.msra.mxu0 0.0
    %182 = vmatprep.subr.mxu0 0.0
    %183 = vmatpush1.msra.mxu0 0.0
    %184 = vmatprep.subr.mxu0 0.0
    %185 = vmatpush1.msra.mxu0 0.0
    %186 = vmatprep.subr.mxu0 0.0
    %187 = vmatpush1.msra.mxu0 0.0
    %188 = vmatprep.subr.mxu0 0.0
    %189 = vmatpush1.msra.mxu0 0.0
    %190 = vmatprep.subr.mxu0 0.0
    %191 = vmatpush1.msra.mxu0 0.0
    %192 = vmatprep.subr.mxu0 0.0
    %193 = vmatpush1.msra.mxu0 0.0
    %194 = vmatprep.subr.mxu0 0.0
    %195 = vmatpush1.msra.mxu0 0.0
    %196 = vmatprep.subr.mxu0 0.0
    %197 = vmatpush1.msra.mxu0 0.0
    %198 = vmatprep.subr.mxu0 0.0
    %199 = vmatpush1.msra.mxu0 0.0
    %200 = vmatprep.subr.mxu0 0.0
    %201 = vmatpush1.msra.mxu0 0.0
    %202 = vmatprep.subr.mxu0 0.0
    %203 = vmatpush1.msra.mxu0 0.0
    %204 = vmatprep.subr.mxu0 0.0
    %205 = vmatpush1.msra.mxu0 0.0
    %206 = vmatprep.subr.mxu0 0.0
    %207 = vmatpush1.msra.mxu0 0.0
    %208 = vmatprep.subr.mxu0 0.0
    %209 = vmatpush1.msra.mxu0 0.0
    %210 = vmatprep.subr.mxu0 0.0
    %211 = vmatpush1.msra.mxu0 0.0
    %212 = vmatprep.subr.mxu0 0.0
    %213 = vmatpush1.msra.mxu0 0.0
    %214 = vmatprep.subr.mxu0 0.0
    %215 = vmatpush1.msra.mxu0 0.0
    %216 = vmatprep.subr.mxu0 0.0
    %217 = vmatpush1.msra.mxu0 0.0
    %218 = vmatprep.subr.mxu0 0.0
    %219 = vmatpush1.msra.mxu0 0.0
    %220 = vmatprep.subr.mxu0 0.0
    %221 = vmatpush1.msra.mxu0 0.0
    %222 = vmatprep.subr.mxu0 0.0
    %223 = vmatpush1.msra.mxu0 0.0
    %224 = vmatprep.subr.mxu0 0.0
    %225 = vmatpush1.msra.mxu0 0.0
    %226 = vmatprep.subr.mxu0 0.0
    %227 = vmatpush1.msra.mxu0 0.0
    %228 = vmatprep.subr.mxu0 0.0
    %229 = vmatpush1.msra.mxu0 0.0
    %230 = vmatprep.subr.mxu0 0.0
    %231 = vmatpush1.msra.mxu0 0.0
    %232 = vmatprep.subr.mxu0 0.0
    %233 = vmatpush1.msra.mxu0 0.0
    %234 = vmatprep.subr.mxu0 0.0
    %235 = vmatpush1.msra.mxu0 0.0
    %236 = vmatprep.subr.mxu0 0.0
    %237 = vmatpush1.msra.mxu0 0.0
    %238 = vmatprep.subr.mxu0 0.0
    %239 = vmatpush1.msra.mxu0 0.0
    %240 = vmatprep.mubr.f32.mxu0 0.0
    %241 = vmatmul.mubr.f32.gmra.mrb[0].mxu0 %v77
    %v242 = vpop.f32.mrb[0].mxu0
    %v243 = vadd.f32 %v73, %v242
    %v244 = vpop.f32.mrb[0].mxu0
    %245 = vmatprep.mubr.f32.mxu0 0.0
    %246 = vmatmul.mubr.f32.gmra.mrb[0].mxu0 %v80
    %v247 = vpop.f32.mrb[0].mxu0
    %v248 = vadd.f32 %v73, %v247
    %v249 = vpop.f32.mrb[0].mxu0
    %250 = vmatprep.mubr.f32.mxu0 0.0
    %251 = vmatmul.mubr.f32.gmra.mrb[0].mxu0 %v83
    %v252 = vpop.f32.mrb[0].mxu0
    %v253 = vadd.f32 %v73, %v252
    %v254 = vpop.f32.mrb[0].mxu0
    %255 = vmatprep.mubr.f32.mxu0 0.0
    %256 = vmatmul.mubr.f32.gmra.mrb[0].mxu0 %v86
    %v257 = vpop.f32.mrb[0].mxu0
    %v258 = vadd.f32 %v73, %v257
    %v259 = vpop.f32.mrb[0].mxu0
    %260 = vmatprep.mubr.f32.mxu0 0.0
    %261 = vmatmul.mubr.f32.gmra.mrb[0].mxu0 %v89
    %v262 = vpop.f32.mrb[0].mxu0
    %v263 = vadd.f32 %v73, %v262
    %v264 = vpop.f32.mrb[0].mxu0
    %265 = vmatprep.mubr.f32.mxu0 0.0
    %266 = vmatmul.mubr.f32.gmra.mrb[0].mxu0 %v92
    %v267 = vpop.f32.mrb[0].mxu0
    %v268 = vadd.f32 %v73, %v267
    %v269 = vpop.f32.mrb[0].mxu0
    %270 = vmatprep.mubr.f32.mxu0 0.0
    %271 = vmatmul.mubr.f32.gmra.mrb[0].mxu0 %v95
    %v272 = vpop.f32.mrb[0].mxu0
    %v273 = vadd.f32 %v73, %v272
    %v274 = vpop.f32.mrb[0].mxu0
    %275 = vmatprep.mubr.f32.mxu0 0.0
    %276 = vmatmul.mubr.f32.gmra.mrb[0].mxu0 %v98
    %v277 = vpop.f32.mrb[0].mxu0
    %v278 = vadd.f32 %v73, %v277
    %v279 = vpop.f32.mrb[0].mxu0
    %280 = vmatprep.mubr.f32.mxu0 0.0
    %281 = vmatmul.mubr.f32.gmra.mrb[0].mxu0 %v101
    %v282 = vpop.f32.mrb[0].mxu0
    %v283 = vadd.f32 %v73, %v282
    %v284 = vpop.f32.mrb[0].mxu0
    %285 = vmatprep.mubr.f32.mxu0 0.0
    %286 = vmatmul.mubr.f32.gmra.mrb[0].mxu0 %v104
    %v287 = vpop.f32.mrb[0].mxu0
    %v288 = vadd.f32 %v73, %v287
    %v289 = vpop.f32.mrb[0].mxu0
    %290 = vmatprep.mubr.f32.mxu0 0.0
    %291 = vmatmul.mubr.f32.gmra.mrb[0].mxu0 %v107
    %v292 = vpop.f32.mrb[0].mxu0
    %v293 = vadd.f32 %v73, %v292
    %v294 = vpop.f32.mrb[0].mxu0
    %295 = vmatprep.mubr.f32.mxu0 0.0
    %296 = vmatmul.mubr.f32.gmra.mrb[0].mxu0 %v110
    %v297 = vpop.f32.mrb[0].mxu0
    %v298 = vadd.f32 %v73, %v297
    %v299 = vpop.f32.mrb[0].mxu0
    %300 = vmatprep.mubr.f32.mxu0 0.0
    %301 = vmatmul.mubr.f32.gmra.mrb[0].mxu0 %v113
    %v302 = vpop.f32.mrb[0].mxu0
    %v303 = vadd.f32 %v73, %v302
    %v304 = vpop.f32.mrb[0].mxu0
    %305 = vmatprep.mubr.f32.mxu0 0.0
    %306 = vmatmul.mubr.f32.gmra.mrb[0].mxu0 %v116
    %v307 = vpop.f32.mrb[0].mxu0
    %v308 = vadd.f32 %v73, %v307
    %v309 = vpop.f32.mrb[0].mxu0
    %310 = vmatprep.mubr.f32.mxu0 0.0
    %311 = vmatmul.mubr.f32.gmra.mrb[0].mxu0 %v119
    %v312 = vpop.f32.mrb[0].mxu0
    %v313 = vadd.f32 %v73, %v312
    %v314 = vpop.f32.mrb[0].mxu0
    %315 = vmatprep.mubr.f32.mxu0 0.0
    %316 = vmatmul.mubr.f32.gmra.mrb[0].mxu0 %v122
    %v317 = vpop.f32.mrb[0].mxu0
    %v318 = vadd.f32 %v73, %v317
    %v319 = vpop.f32.mrb[0].mxu0
    %320 = vmatprep.mubr.f32.mxu0 0.0
    %321 = vmatmul.mubr.f32.gmra.mrb[0].mxu0 %v125
    %v322 = vpop.f32.mrb[0].mxu0
    %v323 = vadd.f32 %v73, %v322
    %v324 = vpop.f32.mrb[0].mxu0
    %325 = vmatprep.mubr.f32.mxu0 0.0
    %326 = vmatmul.mubr.f32.gmra.mrb[0].mxu0 %v128
    %v327 = vpop.f32.mrb[0].mxu0
    %v328 = vadd.f32 %v73, %v327
    %v329 = vpop.f32.mrb[0].mxu0
    %330 = vmatprep.mubr.f32.mxu0 0.0
    %331 = vmatmul.mubr.f32.gmra.mrb[0].mxu0 %v131
    %v332 = vpop.f32.mrb[0].mxu0
    %v333 = vadd.f32 %v73, %v332
    %v334 = vpop.f32.mrb[0].mxu0
    %335 = vmatprep.mubr.f32.mxu0 0.0
    %336 = vmatmul.mubr.f32.gmra.mrb[0].mxu0 %v134
    %v337 = vpop.f32.mrb[0].mxu0
    %v338 = vadd.f32 %v73, %v337
    %v339 = vpop.f32.mrb[0].mxu0
    %340 = vmatprep.mubr.f32.mxu0 0.0
    %341 = vmatmul.mubr.f32.gmra.mrb[0].mxu0 %v137
    %v342 = vpop.f32.mrb[0].mxu0
    %v343 = vadd.f32 %v73, %v342
    %v344 = vpop.f32.mrb[0].mxu0
    %345 = vmatprep.mubr.f32.mxu0 0.0
    %346 = vmatmul.mubr.f32.gmra.mrb[0].mxu0 %v140
    %v347 = vpop.f32.mrb[0].mxu0
    %v348 = vadd.f32 %v73, %v347
    %v349 = vpop.f32.mrb[0].mxu0
    %350 = vmatprep.mubr.f32.mxu0 0.0
    %351 = vmatmul.mubr.f32.gmra.mrb[0].mxu0 %v143
    %v352 = vpop.f32.mrb[0].mxu0
    %v353 = vadd.f32 %v73, %v352
    %v354 = vpop.f32.mrb[0].mxu0
    %355 = vmatprep.mubr.f32.mxu0 0.0
    %356 = vmatmul.mubr.f32.gmra.mrb[0].mxu0 %v146
    %v357 = vpop.f32.mrb[0].mxu0
    %v358 = vadd.f32 %v73, %v357
    %v359 = vpop.f32.mrb[0].mxu0
    %360 = vmatprep.mubr.f32.mxu0 0.0
    %361 = vmatmul.mubr.f32.gmra.mrb[0].mxu0 %v149
    %v362 = vpop.f32.mrb[0].mxu0
    %v363 = vadd.f32 %v73, %v362
    %v364 = vpop.f32.mrb[0].mxu0
    %365 = vmatprep.mubr.f32.mxu0 0.0
    %366 = vmatmul.mubr.f32.gmra.mrb[0].mxu0 %v152
    %v367 = vpop.f32.mrb[0].mxu0
    %v368 = vadd.f32 %v73, %v367
    %v369 = vpop.f32.mrb[0].mxu0
    %370 = vmatprep.mubr.f32.mxu0 0.0
    %371 = vmatmul.mubr.f32.gmra.mrb[0].mxu0 %v155
    %v372 = vpop.f32.mrb[0].mxu0
    %v373 = vadd.f32 %v73, %v372
    %v374 = vpop.f32.mrb[0].mxu0
    %375 = vmatprep.mubr.f32.mxu0 0.0
    %376 = vmatmul.mubr.f32.gmra.mrb[0].mxu0 %v158
    %v377 = vpop.f32.mrb[0].mxu0
    %v378 = vadd.f32 %v73, %v377
    %v379 = vpop.f32.mrb[0].mxu0
    %380 = vmatprep.mubr.f32.mxu0 0.0
    %381 = vmatmul.mubr.f32.gmra.mrb[0].mxu0 %v161
    %v382 = vpop.f32.mrb[0].mxu0
    %v383 = vadd.f32 %v73, %v382
    %v384 = vpop.f32.mrb[0].mxu0
    %385 = vmatprep.mubr.f32.mxu0 0.0
    %386 = vmatmul.mubr.f32.gmra.mrb[0].mxu0 %v164
    %v387 = vpop.f32.mrb[0].mxu0
    %v388 = vadd.f32 %v73, %v387
    %v389 = vpop.f32.mrb[0].mxu0
    %390 = vmatprep.mubr.f32.mxu0 0.0
    %391 = vmatmul.mubr.f32.gmra.mrb[0].mxu0 %v167
    %v392 = vpop.f32.mrb[0].mxu0
    %v393 = vadd.f32 %v73, %v392
    %v394 = vpop.f32.mrb[0].mxu0
    %395 = vmatprep.mubr.f32.mxu0 0.0
    %396 = vmatmul.mubr.f32.gmra.mrb[0].mxu0 %v170
    %v397 = vpop.f32.mrb[0].mxu0
    %v398 = vadd.f32 %v73, %v397
    %v399 = vpop.f32.mrb[0].mxu0
    %400 = vdwg.mxu0
    %v401 = vld [vmem:[%s4] sm:$0x1]
    %v403 = vlaneseq
    %v404 = vshrl.u32 %v403, 7
    %v405 = vsub.s32 0, %v404
    %v406 = vrot.slane %v401, %v405
    %v408 = vcombine.low %v243, %v263
    %v409 = vcombine.high %v243, %v263
    %v411 = vunpack.c.l.s4 1983009808
    %v412 = vunpack.c.0.s8 %v411
    %v413 = vlaneseq
    %v414 = vshrl.u32 %v413, 7
    %v415 = vsub.s32 %v412, %v414
    %v416 = vrot.slane %v408, %v415
    %v418 = vunpack.c.l.s4 1983009808
    %v419 = vunpack.c.0.s8 %v418
    %v420 = vlaneseq
    %v421 = vshrl.u32 %v420, 7
    %v422 = vsub.s32 %v419, %v421
    %v423 = vrot.slane %v409, %v422
    %v424 = vcombine.low %v253, %v273
    %v425 = vcombine.high %v253, %v273
    %v427 = vunpack.c.l.s4 1983009808
    %v428 = vunpack.c.0.s8 %v427
    %v429 = vlaneseq
    %v430 = vshrl.u32 %v429, 7
    %v431 = vsub.s32 %v428, %v430
    %v432 = vrot.slane %v424, %v431
    %v434 = vunpack.c.l.s4 1983009808
    %v435 = vunpack.c.0.s8 %v434
    %v436 = vlaneseq
    %v437 = vshrl.u32 %v436, 7
    %v438 = vsub.s32 %v435, %v437
    %v439 = vrot.slane %v425, %v438
    %v440 = vcombine.low %v283, %v303
    %v441 = vcombine.high %v283, %v303
    %v443 = vunpack.c.l.s4 1983009808
    %v444 = vunpack.c.0.s8 %v443
    %v445 = vlaneseq
    %v446 = vshrl.u32 %v445, 7
    %v447 = vsub.s32 %v444, %v446
    %v448 = vrot.slane %v440, %v447
    %v450 = vunpack.c.l.s4 1983009808
    %v451 = vunpack.c.0.s8 %v450
    %v452 = vlaneseq
    %v453 = vshrl.u32 %v452, 7
    %v454 = vsub.s32 %v451, %v453
    %v455 = vrot.slane %v441, %v454
    %v456 = vcombine.low %v293, %v313
    %v457 = vcombine.high %v293, %v313
    %v459 = vunpack.c.l.s4 1983009808
    %v460 = vunpack.c.0.s8 %v459
    %v461 = vlaneseq
    %v462 = vshrl.u32 %v461, 7
    %v463 = vsub.s32 %v460, %v462
    %v464 = vrot.slane %v456, %v463
    %v466 = vunpack.c.l.s4 1983009808
    %v467 = vunpack.c.0.s8 %v466
    %v468 = vlaneseq
    %v469 = vshrl.u32 %v468, 7
    %v470 = vsub.s32 %v467, %v469
    %v471 = vrot.slane %v457, %v470
    %v472 = vcombine.low %v416, %v432
    %v473 = vcombine.high %v416, %v432
    %v475 = vunpack.c.l.s4 1934713408
    %v476 = vunpack.c.0.s8 %v475
    %v477 = vlaneseq
    %v478 = vshrl.u32 %v477, 7
    %v479 = vsub.s32 %v476, %v478
    %v480 = vrot.slane %v472, %v479
    %v482 = vunpack.c.l.s4 1934713408
    %v483 = vunpack.c.0.s8 %v482
    %v484 = vlaneseq
    %v485 = vshrl.u32 %v484, 7
    %v486 = vsub.s32 %v483, %v485
    %v487 = vrot.slane %v473, %v486
    %v488 = vcombine.low %v423, %v439
    %v489 = vcombine.high %v423, %v439
    %v491 = vunpack.c.l.s4 1934713408
    %v492 = vunpack.c.0.s8 %v491
    %v493 = vlaneseq
    %v494 = vshrl.u32 %v493, 7
    %v495 = vsub.s32 %v492, %v494
    %v496 = vrot.slane %v488, %v495
    %v498 = vunpack.c.l.s4 1934713408
    %v499 = vunpack.c.0.s8 %v498
    %v500 = vlaneseq
    %v501 = vshrl.u32 %v500, 7
    %v502 = vsub.s32 %v499, %v501
    %v503 = vrot.slane %v489, %v502
    %v504 = vcombine.low %v448, %v464
    %v505 = vcombine.high %v448, %v464
    %v507 = vunpack.c.l.s4 1934713408
    %v508 = vunpack.c.0.s8 %v507
    %v509 = vlaneseq
    %v510 = vshrl.u32 %v509, 7
    %v511 = vsub.s32 %v508, %v510
    %v512 = vrot.slane %v504, %v511
    %v514 = vunpack.c.l.s4 1934713408
    %v515 = vunpack.c.0.s8 %v514
    %v516 = vlaneseq
    %v517 = vshrl.u32 %v516, 7
    %v518 = vsub.s32 %v515, %v517
    %v519 = vrot.slane %v505, %v518
    %v520 = vcombine.low %v455, %v471
    %v521 = vcombine.high %v455, %v471
    %v523 = vunpack.c.l.s4 1934713408
    %v524 = vunpack.c.0.s8 %v523
    %v525 = vlaneseq
    %v526 = vshrl.u32 %v525, 7
    %v527 = vsub.s32 %v524, %v526
    %v528 = vrot.slane %v520, %v527
    %v530 = vunpack.c.l.s4 1934713408
    %v531 = vunpack.c.0.s8 %v530
    %v532 = vlaneseq
    %v533 = vshrl.u32 %v532, 7
    %v534 = vsub.s32 %v531, %v533
    %v535 = vrot.slane %v521, %v534
    %v536 = vcombine.low %v480, %v512
    %v537 = vcombine.high %v480, %v512
    %v538 = vcombine.low %v487, %v519
    %v539 = vcombine.high %v487, %v519
    %v540 = vcombine.low %v496, %v528
    %v541 = vcombine.high %v496, %v528
    %v542 = vcombine.low %v503, %v535
    %v543 = vcombine.high %v503, %v535
    %v544 = vcombine.low %v323, %v343
    %v545 = vcombine.high %v323, %v343
    %v547 = vunpack.c.l.s4 1983009808
    %v548 = vunpack.c.0.s8 %v547
    %v549 = vlaneseq
    %v550 = vshrl.u32 %v549, 7
    %v551 = vsub.s32 %v548, %v550
    %v552 = vrot.slane %v544, %v551
    %v554 = vunpack.c.l.s4 1983009808
    %v555 = vunpack.c.0.s8 %v554
    %v556 = vlaneseq
    %v557 = vshrl.u32 %v556, 7
    %v558 = vsub.s32 %v555, %v557
    %v559 = vrot.slane %v545, %v558
    %v560 = vcombine.low %v333, %v353
    %v561 = vcombine.high %v333, %v353
    %v563 = vunpack.c.l.s4 1983009808
    %v564 = vunpack.c.0.s8 %v563
    %v565 = vlaneseq
    %v566 = vshrl.u32 %v565, 7
    %v567 = vsub.s32 %v564, %v566
    %v568 = vrot.slane %v560, %v567
    %v570 = vunpack.c.l.s4 1983009808
    %v571 = vunpack.c.0.s8 %v570
    %v572 = vlaneseq
    %v573 = vshrl.u32 %v572, 7
    %v574 = vsub.s32 %v571, %v573
    %v575 = vrot.slane %v561, %v574
    %v576 = vcombine.low %v363, %v383
    %v577 = vcombine.high %v363, %v383
    %v579 = vunpack.c.l.s4 1983009808
    %v580 = vunpack.c.0.s8 %v579
    %v581 = vlaneseq
    %v582 = vshrl.u32 %v581, 7
    %v583 = vsub.s32 %v580, %v582
    %v584 = vrot.slane %v576, %v583
    %v586 = vunpack.c.l.s4 1983009808
    %v587 = vunpack.c.0.s8 %v586
    %v588 = vlaneseq
    %v589 = vshrl.u32 %v588, 7
    %v590 = vsub.s32 %v587, %v589
    %v591 = vrot.slane %v577, %v590
    %v592 = vcombine.low %v373, %v393
    %v593 = vcombine.high %v373, %v393
    %v595 = vunpack.c.l.s4 1983009808
    %v596 = vunpack.c.0.s8 %v595
    %v597 = vlaneseq
    %v598 = vshrl.u32 %v597, 7
    %v599 = vsub.s32 %v596, %v598
    %v600 = vrot.slane %v592, %v599
    %v602 = vunpack.c.l.s4 1983009808
    %v603 = vunpack.c.0.s8 %v602
    %v604 = vlaneseq
    %v605 = vshrl.u32 %v604, 7
    %v606 = vsub.s32 %v603, %v605
    %v607 = vrot.slane %v593, %v606
    %v608 = vcombine.low %v552, %v568
    %v609 = vcombine.high %v552, %v568
    %v611 = vunpack.c.l.s4 1934713408
    %v612 = vunpack.c.0.s8 %v611
    %v613 = vlaneseq
    %v614 = vshrl.u32 %v613, 7
    %v615 = vsub.s32 %v612, %v614
    %v616 = vrot.slane %v608, %v615
    %v618 = vunpack.c.l.s4 1934713408
    %v619 = vunpack.c.0.s8 %v618
    %v620 = vlaneseq
    %v621 = vshrl.u32 %v620, 7
    %v622 = vsub.s32 %v619, %v621
    %v623 = vrot.slane %v609, %v622
    %v624 = vcombine.low %v559, %v575
    %v625 = vcombine.high %v559, %v575
    %v627 = vunpack.c.l.s4 1934713408
    %v628 = vunpack.c.0.s8 %v627
    %v629 = vlaneseq
    %v630 = vshrl.u32 %v629, 7
    %v631 = vsub.s32 %v628, %v630
    %v632 = vrot.slane %v624, %v631
    %v634 = vunpack.c.l.s4 1934713408
    %v635 = vunpack.c.0.s8 %v634
    %v636 = vlaneseq
    %v637 = vshrl.u32 %v636, 7
    %v638 = vsub.s32 %v635, %v637
    %v639 = vrot.slane %v625, %v638
    %v640 = vcombine.low %v584, %v600
    %v641 = vcombine.high %v584, %v600
    %v643 = vunpack.c.l.s4 1934713408
    %v644 = vunpack.c.0.s8 %v643
    %v645 = vlaneseq
    %v646 = vshrl.u32 %v645, 7
    %v647 = vsub.s32 %v644, %v646
    %v648 = vrot.slane %v640, %v647
    %v650 = vunpack.c.l.s4 1934713408
    %v651 = vunpack.c.0.s8 %v650
    %v652 = vlaneseq
    %v653 = vshrl.u32 %v652, 7
    %v654 = vsub.s32 %v651, %v653
    %v655 = vrot.slane %v641, %v654
    %v656 = vcombine.low %v591, %v607
    %v657 = vcombine.high %v591, %v607
    %v659 = vunpack.c.l.s4 1934713408
    %v660 = vunpack.c.0.s8 %v659
    %v661 = vlaneseq
    %v662 = vshrl.u32 %v661, 7
    %v663 = vsub.s32 %v660, %v662
    %v664 = vrot.slane %v656, %v663
    %v666 = vunpack.c.l.s4 1934713408
    %v667 = vunpack.c.0.s8 %v666
    %v668 = vlaneseq
    %v669 = vshrl.u32 %v668, 7
    %v670 = vsub.s32 %v667, %v669
    %v671 = vrot.slane %v657, %v670
    %v672 = vcombine.low %v616, %v648
    %v673 = vcombine.high %v616, %v648
    %v674 = vcombine.low %v623, %v655
    %v675 = vcombine.high %v623, %v655
    %v676 = vcombine.low %v632, %v664
    %v677 = vcombine.high %v632, %v664
    %v678 = vcombine.low %v639, %v671
    %v679 = vcombine.high %v639, %v671
    %v680 = vcombine.low %v248, %v268
    %v681 = vcombine.high %v248, %v268
    %v683 = vunpack.c.l.s4 1983009808
    %v684 = vunpack.c.0.s8 %v683
    %v685 = vlaneseq
    %v686 = vshrl.u32 %v685, 7
    %v687 = vsub.s32 %v684, %v686
    %v688 = vrot.slane %v680, %v687
    %v690 = vunpack.c.l.s4 1983009808
    %v691 = vunpack.c.0.s8 %v690
    %v692 = vlaneseq
    %v693 = vshrl.u32 %v692, 7
    %v694 = vsub.s32 %v691, %v693
    %v695 = vrot.slane %v681, %v694
    %v696 = vcombine.low %v258, %v278
    %v697 = vcombine.high %v258, %v278
    %v699 = vunpack.c.l.s4 1983009808
    %v700 = vunpack.c.0.s8 %v699
    %v701 = vlaneseq
    %v702 = vshrl.u32 %v701, 7
    %v703 = vsub.s32 %v700, %v702
    %v704 = vrot.slane %v696, %v703
    %v706 = vunpack.c.l.s4 1983009808
    %v707 = vunpack.c.0.s8 %v706
    %v708 = vlaneseq
    %v709 = vshrl.u32 %v708, 7
    %v710 = vsub.s32 %v707, %v709
    %v711 = vrot.slane %v697, %v710
    %v712 = vcombine.low %v288, %v308
    %v713 = vcombine.high %v288, %v308
    %v715 = vunpack.c.l.s4 1983009808
    %v716 = vunpack.c.0.s8 %v715
    %v717 = vlaneseq
    %v718 = vshrl.u32 %v717, 7
    %v719 = vsub.s32 %v716, %v718
    %v720 = vrot.slane %v712, %v719
    %v722 = vunpack.c.l.s4 1983009808
    %v723 = vunpack.c.0.s8 %v722
    %v724 = vlaneseq
    %v725 = vshrl.u32 %v724, 7
    %v726 = vsub.s32 %v723, %v725
    %v727 = vrot.slane %v713, %v726
    %v728 = vcombine.low %v298, %v318
    %v729 = vcombine.high %v298, %v318
    %v731 = vunpack.c.l.s4 1983009808
    %v732 = vunpack.c.0.s8 %v731
    %v733 = vlaneseq
    %v734 = vshrl.u32 %v733, 7
    %v735 = vsub.s32 %v732, %v734
    %v736 = vrot.slane %v728, %v735
    %v738 = vunpack.c.l.s4 1983009808
    %v739 = vunpack.c.0.s8 %v738
    %v740 = vlaneseq
    %v741 = vshrl.u32 %v740, 7
    %v742 = vsub.s32 %v739, %v741
    %v743 = vrot.slane %v729, %v742
    %v744 = vcombine.low %v688, %v704
    %v745 = vcombine.high %v688, %v704
    %v747 = vunpack.c.l.s4 1934713408
    %v748 = vunpack.c.0.s8 %v747
    %v749 = vlaneseq
    %v750 = vshrl.u32 %v749, 7
    %v751 = vsub.s32 %v748, %v750
    %v752 = vrot.slane %v744, %v751
    %v754 = vunpack.c.l.s4 1934713408
    %v755 = vunpack.c.0.s8 %v754
    %v756 = vlaneseq
    %v757 = vshrl.u32 %v756, 7
    %v758 = vsub.s32 %v755, %v757
    %v759 = vrot.slane %v745, %v758
    %v760 = vcombine.low %v695, %v711
    %v761 = vcombine.high %v695, %v711
    %v763 = vunpack.c.l.s4 1934713408
    %v764 = vunpack.c.0.s8 %v763
    %v765 = vlaneseq
    %v766 = vshrl.u32 %v765, 7
    %v767 = vsub.s32 %v764, %v766
    %v768 = vrot.slane %v760, %v767
    %v770 = vunpack.c.l.s4 1934713408
    %v771 = vunpack.c.0.s8 %v770
    %v772 = vlaneseq
    %v773 = vshrl.u32 %v772, 7
    %v774 = vsub.s32 %v771, %v773
    %v775 = vrot.slane %v761, %v774
    %v776 = vcombine.low %v720, %v736
    %v777 = vcombine.high %v720, %v736
    %v779 = vunpack.c.l.s4 1934713408
    %v780 = vunpack.c.0.s8 %v779
    %v781 = vlaneseq
    %v782 = vshrl.u32 %v781, 7
    %v783 = vsub.s32 %v780, %v782
    %v784 = vrot.slane %v776, %v783
    %v786 = vunpack.c.l.s4 1934713408
    %v787 = vunpack.c.0.s8 %v786
    %v788 = vlaneseq
    %v789 = vshrl.u32 %v788, 7
    %v790 = vsub.s32 %v787, %v789
    %v791 = vrot.slane %v777, %v790
    %v792 = vcombine.low %v727, %v743
    %v793 = vcombine.high %v727, %v743
    %v795 = vunpack.c.l.s4 1934713408
    %v796 = vunpack.c.0.s8 %v795
    %v797 = vlaneseq
    %v798 = vshrl.u32 %v797, 7
    %v799 = vsub.s32 %v796, %v798
    %v800 = vrot.slane %v792, %v799
    %v802 = vunpack.c.l.s4 1934713408
    %v803 = vunpack.c.0.s8 %v802
    %v804 = vlaneseq
    %v805 = vshrl.u32 %v804, 7
    %v806 = vsub.s32 %v803, %v805
    %v807 = vrot.slane %v793, %v806
    %v808 = vcombine.low %v752, %v784
    %v809 = vcombine.high %v752, %v784
    %v810 = vcombine.low %v759, %v791
    %v811 = vcombine.high %v759, %v791
    %v812 = vcombine.low %v768, %v800
    %v813 = vcombine.high %v768, %v800
    %v814 = vcombine.low %v775, %v807
    %v815 = vcombine.high %v775, %v807
    %v816 = vcombine.low %v328, %v348
    %v817 = vcombine.high %v328, %v348
    %v819 = vunpack.c.l.s4 1983009808
    %v820 = vunpack.c.0.s8 %v819
    %v821 = vlaneseq
    %v822 = vshrl.u32 %v821, 7
    %v823 = vsub.s32 %v820, %v822
    %v824 = vrot.slane %v816, %v823
    %v826 = vunpack.c.l.s4 1983009808
    %v827 = vunpack.c.0.s8 %v826
    %v828 = vlaneseq
    %v829 = vshrl.u32 %v828, 7
    %v830 = vsub.s32 %v827, %v829
    %v831 = vrot.slane %v817, %v830
    %v832 = vcombine.low %v338, %v358
    %v833 = vcombine.high %v338, %v358
    %v835 = vunpack.c.l.s4 1983009808
    %v836 = vunpack.c.0.s8 %v835
    %v837 = vlaneseq
    %v838 = vshrl.u32 %v837, 7
    %v839 = vsub.s32 %v836, %v838
    %v840 = vrot.slane %v832, %v839
    %v842 = vunpack.c.l.s4 1983009808
    %v843 = vunpack.c.0.s8 %v842
    %v844 = vlaneseq
    %v845 = vshrl.u32 %v844, 7
    %v846 = vsub.s32 %v843, %v845
    %v847 = vrot.slane %v833, %v846
    %v848 = vcombine.low %v368, %v388
    %v849 = vcombine.high %v368, %v388
    %v851 = vunpack.c.l.s4 1983009808
    %v852 = vunpack.c.0.s8 %v851
    %v853 = vlaneseq
    %v854 = vshrl.u32 %v853, 7
    %v855 = vsub.s32 %v852, %v854
    %v856 = vrot.slane %v848, %v855
    %v858 = vunpack.c.l.s4 1983009808
    %v859 = vunpack.c.0.s8 %v858
    %v860 = vlaneseq
    %v861 = vshrl.u32 %v860, 7
    %v862 = vsub.s32 %v859, %v861
    %v863 = vrot.slane %v849, %v862
    %v864 = vcombine.low %v378, %v398
    %v865 = vcombine.high %v378, %v398
    %v867 = vunpack.c.l.s4 1983009808
    %v868 = vunpack.c.0.s8 %v867
    %v869 = vlaneseq
    %v870 = vshrl.u32 %v869, 7
    %v871 = vsub.s32 %v868, %v870
    %v872 = vrot.slane %v864, %v871
    %v874 = vunpack.c.l.s4 1983009808
    %v875 = vunpack.c.0.s8 %v874
    %v876 = vlaneseq
    %v877 = vshrl.u32 %v876, 7
    %v878 = vsub.s32 %v875, %v877
    %v879 = vrot.slane %v865, %v878
    %v880 = vcombine.low %v824, %v840
    %v881 = vcombine.high %v824, %v840
    %v883 = vunpack.c.l.s4 1934713408
    %v884 = vunpack.c.0.s8 %v883
    %v885 = vlaneseq
    %v886 = vshrl.u32 %v885, 7
    %v887 = vsub.s32 %v884, %v886
    %v888 = vrot.slane %v880, %v887
    %v890 = vunpack.c.l.s4 1934713408
    %v891 = vunpack.c.0.s8 %v890
    %v892 = vlaneseq
    %v893 = vshrl.u32 %v892, 7
    %v894 = vsub.s32 %v891, %v893
    %v895 = vrot.slane %v881, %v894
    %v896 = vcombine.low %v831, %v847
    %v897 = vcombine.high %v831, %v847
    %v899 = vunpack.c.l.s4 1934713408
    %v900 = vunpack.c.0.s8 %v899
    %v901 = vlaneseq
    %v902 = vshrl.u32 %v901, 7
    %v903 = vsub.s32 %v900, %v902
    %v904 = vrot.slane %v896, %v903
    %v906 = vunpack.c.l.s4 1934713408
    %v907 = vunpack.c.0.s8 %v906
    %v908 = vlaneseq
    %v909 = vshrl.u32 %v908, 7
    %v910 = vsub.s32 %v907, %v909
    %v911 = vrot.slane %v897, %v910
    %v912 = vcombine.low %v856, %v872
    %v913 = vcombine.high %v856, %v872
    %v915 = vunpack.c.l.s4 1934713408
    %v916 = vunpack.c.0.s8 %v915
    %v917 = vlaneseq
    %v918 = vshrl.u32 %v917, 7
    %v919 = vsub.s32 %v916, %v918
    %v920 = vrot.slane %v912, %v919
    %v922 = vunpack.c.l.s4 1934713408
    %v923 = vunpack.c.0.s8 %v922
    %v924 = vlaneseq
    %v925 = vshrl.u32 %v924, 7
    %v926 = vsub.s32 %v923, %v925
    %v927 = vrot.slane %v913, %v926
    %v928 = vcombine.low %v863, %v879
    %v929 = vcombine.high %v863, %v879
    %v931 = vunpack.c.l.s4 1934713408
    %v932 = vunpack.c.0.s8 %v931
    %v933 = vlaneseq
    %v934 = vshrl.u32 %v933, 7
    %v935 = vsub.s32 %v932, %v934
    %v936 = vrot.slane %v928, %v935
    %v938 = vunpack.c.l.s4 1934713408
    %v939 = vunpack.c.0.s8 %v938
    %v940 = vlaneseq
    %v941 = vshrl.u32 %v940, 7
    %v942 = vsub.s32 %v939, %v941
    %v943 = vrot.slane %v929, %v942
    %v944 = vcombine.low %v888, %v920
    %v945 = vcombine.high %v888, %v920
    %v946 = vcombine.low %v895, %v927
    %v947 = vcombine.high %v895, %v927
    %v948 = vcombine.low %v904, %v936
    %v949 = vcombine.high %v904, %v936
    %v950 = vcombine.low %v911, %v943
    %v951 = vcombine.high %v911, %v943
    %954 = vrot.lane.b32.xlu0 %v537, 32
    %v955 = vpop.permute.xlu0 %954
    %956 = vrot.lane.b32.xlu0 %v673, 32
    %v957 = vpop.permute.xlu0 %956
    %962 = vrot.lane.b32.xlu0 %v538, 64
    %v963 = vpop.permute.xlu0 %962
    %964 = vrot.lane.b32.xlu0 %v674, 64
    %v965 = vpop.permute.xlu0 %964
    %970 = vrot.lane.b32.xlu0 %v539, 96
    %v971 = vpop.permute.xlu0 %970
    %972 = vrot.lane.b32.xlu0 %v675, 96
    %v973 = vpop.permute.xlu0 %972
    %978 = vrot.lane.b32.xlu0 %v541, 32
    %v979 = vpop.permute.xlu0 %978
    %980 = vrot.lane.b32.xlu0 %v677, 32
    %v981 = vpop.permute.xlu0 %980
    %986 = vrot.lane.b32.xlu0 %v542, 64
    %v987 = vpop.permute.xlu0 %986
    %988 = vrot.lane.b32.xlu0 %v678, 64
    %v989 = vpop.permute.xlu0 %988
    %994 = vrot.lane.b32.xlu0 %v543, 96
    %v995 = vpop.permute.xlu0 %994
    %996 = vrot.lane.b32.xlu0 %v679, 96
    %v997 = vpop.permute.xlu0 %996
    %1002 = vrot.lane.b32.xlu0 %v809, 32
    %v1003 = vpop.permute.xlu0 %1002
    %1004 = vrot.lane.b32.xlu0 %v945, 32
    %v1005 = vpop.permute.xlu0 %1004
    %1010 = vrot.lane.b32.xlu0 %v810, 64
    %v1011 = vpop.permute.xlu0 %1010
    %1012 = vrot.lane.b32.xlu0 %v946, 64
    %v1013 = vpop.permute.xlu0 %1012
    %1018 = vrot.lane.b32.xlu0 %v811, 96
    %v1019 = vpop.permute.xlu0 %1018
    %1020 = vrot.lane.b32.xlu0 %v947, 96
    %v1021 = vpop.permute.xlu0 %1020
    %1026 = vrot.lane.b32.xlu0 %v813, 32
    %v1027 = vpop.permute.xlu0 %1026
    %1028 = vrot.lane.b32.xlu0 %v949, 32
    %v1029 = vpop.permute.xlu0 %1028
    %1034 = vrot.lane.b32.xlu0 %v814, 64
    %v1035 = vpop.permute.xlu0 %1034
    %1036 = vrot.lane.b32.xlu0 %v950, 64
    %v1037 = vpop.permute.xlu0 %1036
    %1042 = vrot.lane.b32.xlu0 %v815, 96
    %v1043 = vpop.permute.xlu0 %1042
    %1044 = vrot.lane.b32.xlu0 %v951, 96
    %v1045 = vpop.permute.xlu0 %1044
    %vm1048 = vcmask 261120
    %v1049 = vsel %vm1048, %v536, %v955
    %v1050 = vsel %vm1048, %v672, %v957
    %vm1051 = vcmask 523264
    %v1052 = vsel %vm1051, %v1049, %v963
    %v1053 = vsel %vm1051, %v1050, %v965
    %vm1054 = vcmask 785408
    %v1055 = vsel %vm1054, %v1052, %v971
    %v1056 = vsel %vm1054, %v1053, %v973
    %v1057 = vsel %vm1048, %v540, %v979
    %v1058 = vsel %vm1048, %v676, %v981
    %v1059 = vsel %vm1051, %v1057, %v987
    %v1060 = vsel %vm1051, %v1058, %v989
    %v1061 = vsel %vm1054, %v1059, %v995
    %v1062 = vsel %vm1054, %v1060, %v997
    %v1063 = vsel %vm1048, %v808, %v1003
    %v1064 = vsel %vm1048, %v944, %v1005
    %v1065 = vsel %vm1051, %v1063, %v1011
    %v1066 = vsel %vm1051, %v1064, %v1013
    %v1067 = vsel %vm1054, %v1065, %v1019
    %v1068 = vsel %vm1054, %v1066, %v1021
    %v1069 = vsel %vm1048, %v812, %v1027
    %v1070 = vsel %vm1048, %v948, %v1029
    %v1071 = vsel %vm1051, %v1069, %v1035
    %v1072 = vsel %vm1051, %v1070, %v1037
    %v1073 = vsel %vm1054, %v1071, %v1043
    %v1074 = vsel %vm1054, %v1072, %v1045
    %v1075 = vcombine.low %v406, %v406
    %v1076 = vcombine.high %v406, %v406
    %v1078 = vunpack.c.l.s4 1983009808
    %v1079 = vunpack.c.0.s8 %v1078
    %v1080 = vlaneseq
    %v1081 = vshrl.u32 %v1080, 7
    %v1082 = vsub.s32 %v1079, %v1081
    %v1083 = vrot.slane %v1075, %v1082
    %v1085 = vunpack.c.l.s4 1983009808
    %v1086 = vunpack.c.0.s8 %v1085
    %v1087 = vlaneseq
    %v1088 = vshrl.u32 %v1087, 7
    %v1089 = vsub.s32 %v1086, %v1088
    %v1090 = vrot.slane %v1076, %v1089
    %v1091 = vcombine.low %v1083, %v1083
    %v1092 = vcombine.high %v1083, %v1083
    %v1094 = vunpack.c.l.s4 1934713408
    %v1095 = vunpack.c.0.s8 %v1094
    %v1096 = vlaneseq
    %v1097 = vshrl.u32 %v1096, 7
    %v1098 = vsub.s32 %v1095, %v1097
    %v1099 = vrot.slane %v1091, %v1098
    %v1101 = vunpack.c.l.s4 1934713408
    %v1102 = vunpack.c.0.s8 %v1101
    %v1103 = vlaneseq
    %v1104 = vshrl.u32 %v1103, 7
    %v1105 = vsub.s32 %v1102, %v1104
    %v1106 = vrot.slane %v1092, %v1105
    %v1107 = vcombine.low %v1090, %v1090
    %v1108 = vcombine.high %v1090, %v1090
    %v1110 = vunpack.c.l.s4 1934713408
    %v1111 = vunpack.c.0.s8 %v1110
    %v1112 = vlaneseq
    %v1113 = vshrl.u32 %v1112, 7
    %v1114 = vsub.s32 %v1111, %v1113
    %v1115 = vrot.slane %v1107, %v1114
    %v1117 = vunpack.c.l.s4 1934713408
    %v1118 = vunpack.c.0.s8 %v1117
    %v1119 = vlaneseq
    %v1120 = vshrl.u32 %v1119, 7
    %v1121 = vsub.s32 %v1118, %v1120
    %v1122 = vrot.slane %v1108, %v1121
    %v1123 = vcombine.low %v1099, %v1099
    %v1124 = vcombine.high %v1099, %v1099
    %v1125 = vcombine.low %v1106, %v1106
    %v1126 = vcombine.high %v1106, %v1106
    %v1127 = vcombine.low %v1115, %v1115
    %v1128 = vcombine.high %v1115, %v1115
    %v1129 = vcombine.low %v1122, %v1122
    %v1130 = vcombine.high %v1122, %v1122
    %1132 = vrot.lane.b32.xlu0 %v1124, 32
    %v1133 = vpop.permute.xlu0 %1132
    %1136 = vrot.lane.b32.xlu0 %v1125, 64
    %v1137 = vpop.permute.xlu0 %1136
    %1140 = vrot.lane.b32.xlu0 %v1126, 96
    %v1141 = vpop.permute.xlu0 %1140
    %1144 = vrot.lane.b32.xlu0 %v1128, 32
    %v1145 = vpop.permute.xlu0 %1144
    %1148 = vrot.lane.b32.xlu0 %v1129, 64
    %v1149 = vpop.permute.xlu0 %1148
    %1152 = vrot.lane.b32.xlu0 %v1130, 96
    %v1153 = vpop.permute.xlu0 %1152
    %v1155 = vsel %vm1048, %v1123, %v1133
    %v1156 = vsel %vm1051, %v1155, %v1137
    %v1157 = vsel %vm1054, %v1156, %v1141
    %v1158 = vsel %vm1048, %v1127, %v1145
    %v1159 = vsel %vm1051, %v1158, %v1149
    %v1160 = vsel %vm1054, %v1159, %v1153
    %vm1161 = vcmask 130048
    %v1163 = vsel %vm1161, %v65, 0
    %v1166 = vsel %vm1161, %v66, 0
    %1168 = vmatprep.subr.mxu0 %v1061
    %1169 = vmatpush1.msra.mxu0 %v1055
    %1170 = vmatprep.subr.mxu0 %v1062
    %1171 = vmatpush1.msra.mxu0 %v1056
    %1172 = vmatprep.subr.mxu0 0.0
    %1173 = vmatpush1.msra.mxu0 0.0
    %1174 = vmatprep.subr.mxu0 0.0
    %1175 = vmatpush1.msra.mxu0 0.0
    %1176 = vmatprep.subr.mxu0 0.0
    %1177 = vmatpush1.msra.mxu0 0.0
    %1178 = vmatprep.subr.mxu0 0.0
    %1179 = vmatpush1.msra.mxu0 0.0
    %1180 = vmatprep.subr.mxu0 0.0
    %1181 = vmatpush1.msra.mxu0 0.0
    %1182 = vmatprep.subr.mxu0 0.0
    %1183 = vmatpush1.msra.mxu0 0.0
    %1184 = vmatprep.subr.mxu0 0.0
    %1185 = vmatpush1.msra.mxu0 0.0
    %1186 = vmatprep.subr.mxu0 0.0
    %1187 = vmatpush1.msra.mxu0 0.0
    %1188 = vmatprep.subr.mxu0 0.0
    %1189 = vmatpush1.msra.mxu0 0.0
    %1190 = vmatprep.subr.mxu0 0.0
    %1191 = vmatpush1.msra.mxu0 0.0
    %1192 = vmatprep.subr.mxu0 0.0
    %1193 = vmatpush1.msra.mxu0 0.0
    %1194 = vmatprep.subr.mxu0 0.0
    %1195 = vmatpush1.msra.mxu0 0.0
    %1196 = vmatprep.subr.mxu0 0.0
    %1197 = vmatpush1.msra.mxu0 0.0
    %1198 = vmatprep.subr.mxu0 0.0
    %1199 = vmatpush1.msra.mxu0 0.0
    %1200 = vmatprep.subr.mxu0 0.0
    %1201 = vmatpush1.msra.mxu0 0.0
    %1202 = vmatprep.subr.mxu0 0.0
    %1203 = vmatpush1.msra.mxu0 0.0
    %1204 = vmatprep.subr.mxu0 0.0
    %1205 = vmatpush1.msra.mxu0 0.0
    %1206 = vmatprep.subr.mxu0 0.0
    %1207 = vmatpush1.msra.mxu0 0.0
    %1208 = vmatprep.subr.mxu0 0.0
    %1209 = vmatpush1.msra.mxu0 0.0
    %1210 = vmatprep.subr.mxu0 0.0
    %1211 = vmatpush1.msra.mxu0 0.0
    %1212 = vmatprep.subr.mxu0 0.0
    %1213 = vmatpush1.msra.mxu0 0.0
    %1214 = vmatprep.subr.mxu0 0.0
    %1215 = vmatpush1.msra.mxu0 0.0
    %1216 = vmatprep.subr.mxu0 0.0
    %1217 = vmatpush1.msra.mxu0 0.0
    %1218 = vmatprep.subr.mxu0 0.0
    %1219 = vmatpush1.msra.mxu0 0.0
    %1220 = vmatprep.subr.mxu0 0.0
    %1221 = vmatpush1.msra.mxu0 0.0
    %1222 = vmatprep.subr.mxu0 0.0
    %1223 = vmatpush1.msra.mxu0 0.0
    %1224 = vmatprep.subr.mxu0 0.0
    %1225 = vmatpush1.msra.mxu0 0.0
    %1226 = vmatprep.subr.mxu0 0.0
    %1227 = vmatpush1.msra.mxu0 0.0
    %1228 = vmatprep.subr.mxu0 0.0
    %1229 = vmatpush1.msra.mxu0 0.0
    %1230 = vmatprep.subr.mxu0 0.0
    %1231 = vmatpush1.msra.mxu0 0.0
    %1232 = vmatprep.mubr.f32.mxu0 0.0
    %1233 = vmatmul.mubr.f32.gmra.mrb[0].mxu0 %v1163
    %v1234 = vpop.f32.mrb[0].mxu0
    %v1235 = vadd.f32 %v1157, %v1234
    %v1236 = vpop.f32.mrb[0].mxu0
    %v1237 = vadd.f32 %v1160, %v1236
    %1238 = vmatprep.mubr.f32.mxu0 0.0
    %1239 = vmatmul.mubr.f32.gmra.mrb[0].mxu0 %v1166
    %v1240 = vpop.f32.mrb[0].mxu0
    %v1241 = vadd.f32 %v1157, %v1240
    %v1242 = vpop.f32.mrb[0].mxu0
    %v1243 = vadd.f32 %v1160, %v1242
    %1244 = vdwg.mxu0
    %1245 = vmatprep.subr.mxu0 %v1073
    %1246 = vmatpush1.msra.mxu0 %v1067
    %1247 = vmatprep.subr.mxu0 %v1074
    %1248 = vmatpush1.msra.mxu0 %v1068
    %1249 = vmatprep.subr.mxu0 0.0
    %1250 = vmatpush1.msra.mxu0 0.0
    %1251 = vmatprep.subr.mxu0 0.0
    %1252 = vmatpush1.msra.mxu0 0.0
    %1253 = vmatprep.subr.mxu0 0.0
    %1254 = vmatpush1.msra.mxu0 0.0
    %1255 = vmatprep.subr.mxu0 0.0
    %1256 = vmatpush1.msra.mxu0 0.0
    %1257 = vmatprep.subr.mxu0 0.0
    %1258 = vmatpush1.msra.mxu0 0.0
    %1259 = vmatprep.subr.mxu0 0.0
    %1260 = vmatpush1.msra.mxu0 0.0
    %1261 = vmatprep.subr.mxu0 0.0
    %1262 = vmatpush1.msra.mxu0 0.0
    %1263 = vmatprep.subr.mxu0 0.0
    %1264 = vmatpush1.msra.mxu0 0.0
    %1265 = vmatprep.subr.mxu0 0.0
    %1266 = vmatpush1.msra.mxu0 0.0
    %1267 = vmatprep.subr.mxu0 0.0
    %1268 = vmatpush1.msra.mxu0 0.0
    %1269 = vmatprep.subr.mxu0 0.0
    %1270 = vmatpush1.msra.mxu0 0.0
    %1271 = vmatprep.subr.mxu0 0.0
    %1272 = vmatpush1.msra.mxu0 0.0
    %1273 = vmatprep.subr.mxu0 0.0
    %1274 = vmatpush1.msra.mxu0 0.0
    %1275 = vmatprep.subr.mxu0 0.0
    %1276 = vmatpush1.msra.mxu0 0.0
    %1277 = vmatprep.subr.mxu0 0.0
    %1278 = vmatpush1.msra.mxu0 0.0
    %1279 = vmatprep.subr.mxu0 0.0
    %1280 = vmatpush1.msra.mxu0 0.0
    %1281 = vmatprep.subr.mxu0 0.0
    %1282 = vmatpush1.msra.mxu0 0.0
    %1283 = vmatprep.subr.mxu0 0.0
    %1284 = vmatpush1.msra.mxu0 0.0
    %1285 = vmatprep.subr.mxu0 0.0
    %1286 = vmatpush1.msra.mxu0 0.0
    %1287 = vmatprep.subr.mxu0 0.0
    %1288 = vmatpush1.msra.mxu0 0.0
    %1289 = vmatprep.subr.mxu0 0.0
    %1290 = vmatpush1.msra.mxu0 0.0
    %1291 = vmatprep.subr.mxu0 0.0
    %1292 = vmatpush1.msra.mxu0 0.0
    %1293 = vmatprep.subr.mxu0 0.0
    %1294 = vmatpush1.msra.mxu0 0.0
    %1295 = vmatprep.subr.mxu0 0.0
    %1296 = vmatpush1.msra.mxu0 0.0
    %1297 = vmatprep.subr.mxu0 0.0
    %1298 = vmatpush1.msra.mxu0 0.0
    %1299 = vmatprep.subr.mxu0 0.0
    %1300 = vmatpush1.msra.mxu0 0.0
    %1301 = vmatprep.subr.mxu0 0.0
    %1302 = vmatpush1.msra.mxu0 0.0
    %1303 = vmatprep.subr.mxu0 0.0
    %1304 = vmatpush1.msra.mxu0 0.0
    %1305 = vmatprep.subr.mxu0 0.0
    %1306 = vmatpush1.msra.mxu0 0.0
    %1307 = vmatprep.subr.mxu0 0.0
    %1308 = vmatpush1.msra.mxu0 0.0
    %1309 = vmatprep.mubr.f32.mxu0 0.0
    %1310 = vmatmul.mubr.f32.gmra.mrb[0].mxu0 %v1163
    %v1311 = vpop.f32.mrb[0].mxu0
    %v1312 = vadd.f32 %v1157, %v1311
    %v1313 = vpop.f32.mrb[0].mxu0
    %v1314 = vadd.f32 %v1160, %v1313
    %1315 = vmatprep.mubr.f32.mxu0 0.0
    %1316 = vmatmul.mubr.f32.gmra.mrb[0].mxu0 %v1166
    %v1317 = vpop.f32.mrb[0].mxu0
    %v1318 = vadd.f32 %v1157, %v1317
    %v1319 = vpop.f32.mrb[0].mxu0
    %v1320 = vadd.f32 %v1160, %v1319
    %1321 = vdwg.mxu0
    %1324 = vrot.lane.b32.xlu0 %v1235, 96
    %v1325 = vpop.permute.xlu0 %1324
    %1326 = vrot.lane.b32.xlu0 %v1241, 96
    %v1327 = vpop.permute.xlu0 %1326
    %1330 = vrot.lane.b32.xlu0 %v1235, 64
    %v1331 = vpop.permute.xlu0 %1330
    %1332 = vrot.lane.b32.xlu0 %v1241, 64
    %v1333 = vpop.permute.xlu0 %1332
    %1336 = vrot.lane.b32.xlu0 %v1235, 32
    %v1337 = vpop.permute.xlu0 %1336
    %1338 = vrot.lane.b32.xlu0 %v1241, 32
    %v1339 = vpop.permute.xlu0 %1338
    %1344 = vrot.lane.b32.xlu0 %v1237, 96
    %v1345 = vpop.permute.xlu0 %1344
    %1346 = vrot.lane.b32.xlu0 %v1243, 96
    %v1347 = vpop.permute.xlu0 %1346
    %1350 = vrot.lane.b32.xlu0 %v1237, 64
    %v1351 = vpop.permute.xlu0 %1350
    %1352 = vrot.lane.b32.xlu0 %v1243, 64
    %v1353 = vpop.permute.xlu0 %1352
    %1356 = vrot.lane.b32.xlu0 %v1237, 32
    %v1357 = vpop.permute.xlu0 %1356
    %1358 = vrot.lane.b32.xlu0 %v1243, 32
    %v1359 = vpop.permute.xlu0 %1358
    %1364 = vrot.lane.b32.xlu0 %v1312, 96
    %v1365 = vpop.permute.xlu0 %1364
    %1366 = vrot.lane.b32.xlu0 %v1318, 96
    %v1367 = vpop.permute.xlu0 %1366
    %1370 = vrot.lane.b32.xlu0 %v1312, 64
    %v1371 = vpop.permute.xlu0 %1370
    %1372 = vrot.lane.b32.xlu0 %v1318, 64
    %v1373 = vpop.permute.xlu0 %1372
    %1376 = vrot.lane.b32.xlu0 %v1312, 32
    %v1377 = vpop.permute.xlu0 %1376
    %1378 = vrot.lane.b32.xlu0 %v1318, 32
    %v1379 = vpop.permute.xlu0 %1378
    %1384 = vrot.lane.b32.xlu0 %v1314, 96
    %v1385 = vpop.permute.xlu0 %1384
    %1386 = vrot.lane.b32.xlu0 %v1320, 96
    %v1387 = vpop.permute.xlu0 %1386
    %1390 = vrot.lane.b32.xlu0 %v1314, 64
    %v1391 = vpop.permute.xlu0 %1390
    %1392 = vrot.lane.b32.xlu0 %v1320, 64
    %v1393 = vpop.permute.xlu0 %1392
    %1396 = vrot.lane.b32.xlu0 %v1314, 32
    %v1397 = vpop.permute.xlu0 %1396
    %1398 = vrot.lane.b32.xlu0 %v1320, 32
    %v1399 = vpop.permute.xlu0 %1398
    %v1402 = vcombine.low %v1235, %v1331
    %v1403 = vcombine.high %v1235, %v1331
    %v1405 = vunpack.c.l.s4 1983009808
    %v1406 = vunpack.c.0.s8 %v1405
    %v1407 = vlaneseq
    %v1408 = vshrl.u32 %v1407, 7
    %v1409 = vsub.s32 %v1406, %v1408
    %v1410 = vrot.slane %v1402, %v1409
    %v1412 = vunpack.c.l.s4 1983009808
    %v1413 = vunpack.c.0.s8 %v1412
    %v1414 = vlaneseq
    %v1415 = vshrl.u32 %v1414, 7
    %v1416 = vsub.s32 %v1413, %v1415
    %v1417 = vrot.slane %v1403, %v1416
    %v1418 = vcombine.low %v1325, %v1337
    %v1419 = vcombine.high %v1325, %v1337
    %v1421 = vunpack.c.l.s4 1983009808
    %v1422 = vunpack.c.0.s8 %v1421
    %v1423 = vlaneseq
    %v1424 = vshrl.u32 %v1423, 7
    %v1425 = vsub.s32 %v1422, %v1424
    %v1426 = vrot.slane %v1418, %v1425
    %v1428 = vunpack.c.l.s4 1983009808
    %v1429 = vunpack.c.0.s8 %v1428
    %v1430 = vlaneseq
    %v1431 = vshrl.u32 %v1430, 7
    %v1432 = vsub.s32 %v1429, %v1431
    %v1433 = vrot.slane %v1419, %v1432
    %v1434 = vcombine.low %v1237, %v1351
    %v1435 = vcombine.high %v1237, %v1351
    %v1437 = vunpack.c.l.s4 1983009808
    %v1438 = vunpack.c.0.s8 %v1437
    %v1439 = vlaneseq
    %v1440 = vshrl.u32 %v1439, 7
    %v1441 = vsub.s32 %v1438, %v1440
    %v1442 = vrot.slane %v1434, %v1441
    %v1444 = vunpack.c.l.s4 1983009808
    %v1445 = vunpack.c.0.s8 %v1444
    %v1446 = vlaneseq
    %v1447 = vshrl.u32 %v1446, 7
    %v1448 = vsub.s32 %v1445, %v1447
    %v1449 = vrot.slane %v1435, %v1448
    %v1450 = vcombine.low %v1345, %v1357
    %v1451 = vcombine.high %v1345, %v1357
    %v1453 = vunpack.c.l.s4 1983009808
    %v1454 = vunpack.c.0.s8 %v1453
    %v1455 = vlaneseq
    %v1456 = vshrl.u32 %v1455, 7
    %v1457 = vsub.s32 %v1454, %v1456
    %v1458 = vrot.slane %v1450, %v1457
    %v1460 = vunpack.c.l.s4 1983009808
    %v1461 = vunpack.c.0.s8 %v1460
    %v1462 = vlaneseq
    %v1463 = vshrl.u32 %v1462, 7
    %v1464 = vsub.s32 %v1461, %v1463
    %v1465 = vrot.slane %v1451, %v1464
    %v1466 = vcombine.low %v1410, %v1426
    %v1467 = vcombine.high %v1410, %v1426
    %v1469 = vunpack.c.l.s4 1934713408
    %v1470 = vunpack.c.0.s8 %v1469
    %v1471 = vlaneseq
    %v1472 = vshrl.u32 %v1471, 7
    %v1473 = vsub.s32 %v1470, %v1472
    %v1474 = vrot.slane %v1466, %v1473
    %v1476 = vunpack.c.l.s4 1934713408
    %v1477 = vunpack.c.0.s8 %v1476
    %v1478 = vlaneseq
    %v1479 = vshrl.u32 %v1478, 7
    %v1480 = vsub.s32 %v1477, %v1479
    %v1481 = vrot.slane %v1467, %v1480
    %v1482 = vcombine.low %v1417, %v1433
    %v1483 = vcombine.high %v1417, %v1433
    %v1485 = vunpack.c.l.s4 1934713408
    %v1486 = vunpack.c.0.s8 %v1485
    %v1487 = vlaneseq
    %v1488 = vshrl.u32 %v1487, 7
    %v1489 = vsub.s32 %v1486, %v1488
    %v1490 = vrot.slane %v1482, %v1489
    %v1492 = vunpack.c.l.s4 1934713408
    %v1493 = vunpack.c.0.s8 %v1492
    %v1494 = vlaneseq
    %v1495 = vshrl.u32 %v1494, 7
    %v1496 = vsub.s32 %v1493, %v1495
    %v1497 = vrot.slane %v1483, %v1496
    %v1498 = vcombine.low %v1442, %v1458
    %v1499 = vcombine.high %v1442, %v1458
    %v1501 = vunpack.c.l.s4 1934713408
    %v1502 = vunpack.c.0.s8 %v1501
    %v1503 = vlaneseq
    %v1504 = vshrl.u32 %v1503, 7
    %v1505 = vsub.s32 %v1502, %v1504
    %v1506 = vrot.slane %v1498, %v1505
    %v1508 = vunpack.c.l.s4 1934713408
    %v1509 = vunpack.c.0.s8 %v1508
    %v1510 = vlaneseq
    %v1511 = vshrl.u32 %v1510, 7
    %v1512 = vsub.s32 %v1509, %v1511
    %v1513 = vrot.slane %v1499, %v1512
    %v1514 = vcombine.low %v1449, %v1465
    %v1515 = vcombine.high %v1449, %v1465
    %v1517 = vunpack.c.l.s4 1934713408
    %v1518 = vunpack.c.0.s8 %v1517
    %v1519 = vlaneseq
    %v1520 = vshrl.u32 %v1519, 7
    %v1521 = vsub.s32 %v1518, %v1520
    %v1522 = vrot.slane %v1514, %v1521
    %v1524 = vunpack.c.l.s4 1934713408
    %v1525 = vunpack.c.0.s8 %v1524
    %v1526 = vlaneseq
    %v1527 = vshrl.u32 %v1526, 7
    %v1528 = vsub.s32 %v1525, %v1527
    %v1529 = vrot.slane %v1515, %v1528
    %v1530 = vcombine.low %v1474, %v1506
    %v1531 = vcombine.high %v1474, %v1506
    %v1532 = vcombine.low %v1481, %v1513
    %v1533 = vcombine.high %v1481, %v1513
    %v1534 = vcombine.low %v1490, %v1522
    %v1535 = vcombine.high %v1490, %v1522
    %v1536 = vcombine.low %v1497, %v1529
    %v1537 = vcombine.high %v1497, %v1529
    %v1538 = vcombine.low %v1312, %v1371
    %v1539 = vcombine.high %v1312, %v1371
    %v1541 = vunpack.c.l.s4 1983009808
    %v1542 = vunpack.c.0.s8 %v1541
    %v1543 = vlaneseq
    %v1544 = vshrl.u32 %v1543, 7
    %v1545 = vsub.s32 %v1542, %v1544
    %v1546 = vrot.slane %v1538, %v1545
    %v1548 = vunpack.c.l.s4 1983009808
    %v1549 = vunpack.c.0.s8 %v1548
    %v1550 = vlaneseq
    %v1551 = vshrl.u32 %v1550, 7
    %v1552 = vsub.s32 %v1549, %v1551
    %v1553 = vrot.slane %v1539, %v1552
    %v1554 = vcombine.low %v1365, %v1377
    %v1555 = vcombine.high %v1365, %v1377
    %v1557 = vunpack.c.l.s4 1983009808
    %v1558 = vunpack.c.0.s8 %v1557
    %v1559 = vlaneseq
    %v1560 = vshrl.u32 %v1559, 7
    %v1561 = vsub.s32 %v1558, %v1560
    %v1562 = vrot.slane %v1554, %v1561
    %v1564 = vunpack.c.l.s4 1983009808
    %v1565 = vunpack.c.0.s8 %v1564
    %v1566 = vlaneseq
    %v1567 = vshrl.u32 %v1566, 7
    %v1568 = vsub.s32 %v1565, %v1567
    %v1569 = vrot.slane %v1555, %v1568
    %v1570 = vcombine.low %v1314, %v1391
    %v1571 = vcombine.high %v1314, %v1391
    %v1573 = vunpack.c.l.s4 1983009808
    %v1574 = vunpack.c.0.s8 %v1573
    %v1575 = vlaneseq
    %v1576 = vshrl.u32 %v1575, 7
    %v1577 = vsub.s32 %v1574, %v1576
    %v1578 = vrot.slane %v1570, %v1577
    %v1580 = vunpack.c.l.s4 1983009808
    %v1581 = vunpack.c.0.s8 %v1580
    %v1582 = vlaneseq
    %v1583 = vshrl.u32 %v1582, 7
    %v1584 = vsub.s32 %v1581, %v1583
    %v1585 = vrot.slane %v1571, %v1584
    %v1586 = vcombine.low %v1385, %v1397
    %v1587 = vcombine.high %v1385, %v1397
    %v1589 = vunpack.c.l.s4 1983009808
    %v1590 = vunpack.c.0.s8 %v1589
    %v1591 = vlaneseq
    %v1592 = vshrl.u32 %v1591, 7
    %v1593 = vsub.s32 %v1590, %v1592
    %v1594 = vrot.slane %v1586, %v1593
    %v1596 = vunpack.c.l.s4 1983009808
    %v1597 = vunpack.c.0.s8 %v1596
    %v1598 = vlaneseq
    %v1599 = vshrl.u32 %v1598, 7
    %v1600 = vsub.s32 %v1597, %v1599
    %v1601 = vrot.slane %v1587, %v1600
    %v1602 = vcombine.low %v1546, %v1562
    %v1603 = vcombine.high %v1546, %v1562
    %v1605 = vunpack.c.l.s4 1934713408
    %v1606 = vunpack.c.0.s8 %v1605
    %v1607 = vlaneseq
    %v1608 = vshrl.u32 %v1607, 7
    %v1609 = vsub.s32 %v1606, %v1608
    %v1610 = vrot.slane %v1602, %v1609
    %v1612 = vunpack.c.l.s4 1934713408
    %v1613 = vunpack.c.0.s8 %v1612
    %v1614 = vlaneseq
    %v1615 = vshrl.u32 %v1614, 7
    %v1616 = vsub.s32 %v1613, %v1615
    %v1617 = vrot.slane %v1603, %v1616
    %v1618 = vcombine.low %v1553, %v1569
    %v1619 = vcombine.high %v1553, %v1569
    %v1621 = vunpack.c.l.s4 1934713408
    %v1622 = vunpack.c.0.s8 %v1621
    %v1623 = vlaneseq
    %v1624 = vshrl.u32 %v1623, 7
    %v1625 = vsub.s32 %v1622, %v1624
    %v1626 = vrot.slane %v1618, %v1625
    %v1628 = vunpack.c.l.s4 1934713408
    %v1629 = vunpack.c.0.s8 %v1628
    %v1630 = vlaneseq
    %v1631 = vshrl.u32 %v1630, 7
    %v1632 = vsub.s32 %v1629, %v1631
    %v1633 = vrot.slane %v1619, %v1632
    %v1634 = vcombine.low %v1578, %v1594
    %v1635 = vcombine.high %v1578, %v1594
    %v1637 = vunpack.c.l.s4 1934713408
    %v1638 = vunpack.c.0.s8 %v1637
    %v1639 = vlaneseq
    %v1640 = vshrl.u32 %v1639, 7
    %v1641 = vsub.s32 %v1638, %v1640
    %v1642 = vrot.slane %v1634, %v1641
    %v1644 = vunpack.c.l.s4 1934713408
    %v1645 = vunpack.c.0.s8 %v1644
    %v1646 = vlaneseq
    %v1647 = vshrl.u32 %v1646, 7
    %v1648 = vsub.s32 %v1645, %v1647
    %v1649 = vrot.slane %v1635, %v1648
    %v1650 = vcombine.low %v1585, %v1601
    %v1651 = vcombine.high %v1585, %v1601
    %v1653 = vunpack.c.l.s4 1934713408
    %v1654 = vunpack.c.0.s8 %v1653
    %v1655 = vlaneseq
    %v1656 = vshrl.u32 %v1655, 7
    %v1657 = vsub.s32 %v1654, %v1656
    %v1658 = vrot.slane %v1650, %v1657
    %v1660 = vunpack.c.l.s4 1934713408
    %v1661 = vunpack.c.0.s8 %v1660
    %v1662 = vlaneseq
    %v1663 = vshrl.u32 %v1662, 7
    %v1664 = vsub.s32 %v1661, %v1663
    %v1665 = vrot.slane %v1651, %v1664
    %v1666 = vcombine.low %v1610, %v1642
    %v1667 = vcombine.high %v1610, %v1642
    %v1668 = vcombine.low %v1617, %v1649
    %v1669 = vcombine.high %v1617, %v1649
    %v1670 = vcombine.low %v1626, %v1658
    %v1671 = vcombine.high %v1626, %v1658
    %v1672 = vcombine.low %v1633, %v1665
    %v1673 = vcombine.high %v1633, %v1665
    %v1674 = vcombine.low %v1241, %v1333
    %v1675 = vcombine.high %v1241, %v1333
    %v1677 = vunpack.c.l.s4 1983009808
    %v1678 = vunpack.c.0.s8 %v1677
    %v1679 = vlaneseq
    %v1680 = vshrl.u32 %v1679, 7
    %v1681 = vsub.s32 %v1678, %v1680
    %v1682 = vrot.slane %v1674, %v1681
    %v1684 = vunpack.c.l.s4 1983009808
    %v1685 = vunpack.c.0.s8 %v1684
    %v1686 = vlaneseq
    %v1687 = vshrl.u32 %v1686, 7
    %v1688 = vsub.s32 %v1685, %v1687
    %v1689 = vrot.slane %v1675, %v1688
    %v1690 = vcombine.low %v1327, %v1339
    %v1691 = vcombine.high %v1327, %v1339
    %v1693 = vunpack.c.l.s4 1983009808
    %v1694 = vunpack.c.0.s8 %v1693
    %v1695 = vlaneseq
    %v1696 = vshrl.u32 %v1695, 7
    %v1697 = vsub.s32 %v1694, %v1696
    %v1698 = vrot.slane %v1690, %v1697
    %v1700 = vunpack.c.l.s4 1983009808
    %v1701 = vunpack.c.0.s8 %v1700
    %v1702 = vlaneseq
    %v1703 = vshrl.u32 %v1702, 7
    %v1704 = vsub.s32 %v1701, %v1703
    %v1705 = vrot.slane %v1691, %v1704
    %v1706 = vcombine.low %v1243, %v1353
    %v1707 = vcombine.high %v1243, %v1353
    %v1709 = vunpack.c.l.s4 1983009808
    %v1710 = vunpack.c.0.s8 %v1709
    %v1711 = vlaneseq
    %v1712 = vshrl.u32 %v1711, 7
    %v1713 = vsub.s32 %v1710, %v1712
    %v1714 = vrot.slane %v1706, %v1713
    %v1716 = vunpack.c.l.s4 1983009808
    %v1717 = vunpack.c.0.s8 %v1716
    %v1718 = vlaneseq
    %v1719 = vshrl.u32 %v1718, 7
    %v1720 = vsub.s32 %v1717, %v1719
    %v1721 = vrot.slane %v1707, %v1720
    %v1722 = vcombine.low %v1347, %v1359
    %v1723 = vcombine.high %v1347, %v1359
    %v1725 = vunpack.c.l.s4 1983009808
    %v1726 = vunpack.c.0.s8 %v1725
    %v1727 = vlaneseq
    %v1728 = vshrl.u32 %v1727, 7
    %v1729 = vsub.s32 %v1726, %v1728
    %v1730 = vrot.slane %v1722, %v1729
    %v1732 = vunpack.c.l.s4 1983009808
    %v1733 = vunpack.c.0.s8 %v1732
    %v1734 = vlaneseq
    %v1735 = vshrl.u32 %v1734, 7
    %v1736 = vsub.s32 %v1733, %v1735
    %v1737 = vrot.slane %v1723, %v1736
    %v1738 = vcombine.low %v1682, %v1698
    %v1739 = vcombine.high %v1682, %v1698
    %v1741 = vunpack.c.l.s4 1934713408
    %v1742 = vunpack.c.0.s8 %v1741
    %v1743 = vlaneseq
    %v1744 = vshrl.u32 %v1743, 7
    %v1745 = vsub.s32 %v1742, %v1744
    %v1746 = vrot.slane %v1738, %v1745
    %v1748 = vunpack.c.l.s4 1934713408
    %v1749 = vunpack.c.0.s8 %v1748
    %v1750 = vlaneseq
    %v1751 = vshrl.u32 %v1750, 7
    %v1752 = vsub.s32 %v1749, %v1751
    %v1753 = vrot.slane %v1739, %v1752
    %v1754 = vcombine.low %v1689, %v1705
    %v1755 = vcombine.high %v1689, %v1705
    %v1757 = vunpack.c.l.s4 1934713408
    %v1758 = vunpack.c.0.s8 %v1757
    %v1759 = vlaneseq
    %v1760 = vshrl.u32 %v1759, 7
    %v1761 = vsub.s32 %v1758, %v1760
    %v1762 = vrot.slane %v1754, %v1761
    %v1764 = vunpack.c.l.s4 1934713408
    %v1765 = vunpack.c.0.s8 %v1764
    %v1766 = vlaneseq
    %v1767 = vshrl.u32 %v1766, 7
    %v1768 = vsub.s32 %v1765, %v1767
    %v1769 = vrot.slane %v1755, %v1768
    %v1770 = vcombine.low %v1714, %v1730
    %v1771 = vcombine.high %v1714, %v1730
    %v1773 = vunpack.c.l.s4 1934713408
    %v1774 = vunpack.c.0.s8 %v1773
    %v1775 = vlaneseq
    %v1776 = vshrl.u32 %v1775, 7
    %v1777 = vsub.s32 %v1774, %v1776
    %v1778 = vrot.slane %v1770, %v1777
    %v1780 = vunpack.c.l.s4 1934713408
    %v1781 = vunpack.c.0.s8 %v1780
    %v1782 = vlaneseq
    %v1783 = vshrl.u32 %v1782, 7
    %v1784 = vsub.s32 %v1781, %v1783
    %v1785 = vrot.slane %v1771, %v1784
    %v1786 = vcombine.low %v1721, %v1737
    %v1787 = vcombine.high %v1721, %v1737
    %v1789 = vunpack.c.l.s4 1934713408
    %v1790 = vunpack.c.0.s8 %v1789
    %v1791 = vlaneseq
    %v1792 = vshrl.u32 %v1791, 7
    %v1793 = vsub.s32 %v1790, %v1792
    %v1794 = vrot.slane %v1786, %v1793
    %v1796 = vunpack.c.l.s4 1934713408
    %v1797 = vunpack.c.0.s8 %v1796
    %v1798 = vlaneseq
    %v1799 = vshrl.u32 %v1798, 7
    %v1800 = vsub.s32 %v1797, %v1799
    %v1801 = vrot.slane %v1787, %v1800
    %v1802 = vcombine.low %v1746, %v1778
    %v1803 = vcombine.high %v1746, %v1778
    %v1804 = vcombine.low %v1753, %v1785
    %v1805 = vcombine.high %v1753, %v1785
    %v1806 = vcombine.low %v1762, %v1794
    %v1807 = vcombine.high %v1762, %v1794
    %v1808 = vcombine.low %v1769, %v1801
    %v1809 = vcombine.high %v1769, %v1801
    %v1810 = vcombine.low %v1318, %v1373
    %v1811 = vcombine.high %v1318, %v1373
    %v1813 = vunpack.c.l.s4 1983009808
    %v1814 = vunpack.c.0.s8 %v1813
    %v1815 = vlaneseq
    %v1816 = vshrl.u32 %v1815, 7
    %v1817 = vsub.s32 %v1814, %v1816
    %v1818 = vrot.slane %v1810, %v1817
    %v1820 = vunpack.c.l.s4 1983009808
    %v1821 = vunpack.c.0.s8 %v1820
    %v1822 = vlaneseq
    %v1823 = vshrl.u32 %v1822, 7
    %v1824 = vsub.s32 %v1821, %v1823
    %v1825 = vrot.slane %v1811, %v1824
    %v1826 = vcombine.low %v1367, %v1379
    %v1827 = vcombine.high %v1367, %v1379
    %v1829 = vunpack.c.l.s4 1983009808
    %v1830 = vunpack.c.0.s8 %v1829
    %v1831 = vlaneseq
    %v1832 = vshrl.u32 %v1831, 7
    %v1833 = vsub.s32 %v1830, %v1832
    %v1834 = vrot.slane %v1826, %v1833
    %v1836 = vunpack.c.l.s4 1983009808
    %v1837 = vunpack.c.0.s8 %v1836
    %v1838 = vlaneseq
    %v1839 = vshrl.u32 %v1838, 7
    %v1840 = vsub.s32 %v1837, %v1839
    %v1841 = vrot.slane %v1827, %v1840
    %v1842 = vcombine.low %v1320, %v1393
    %v1843 = vcombine.high %v1320, %v1393
    %v1845 = vunpack.c.l.s4 1983009808
    %v1846 = vunpack.c.0.s8 %v1845
    %v1847 = vlaneseq
    %v1848 = vshrl.u32 %v1847, 7
    %v1849 = vsub.s32 %v1846, %v1848
    %v1850 = vrot.slane %v1842, %v1849
    %v1852 = vunpack.c.l.s4 1983009808
    %v1853 = vunpack.c.0.s8 %v1852
    %v1854 = vlaneseq
    %v1855 = vshrl.u32 %v1854, 7
    %v1856 = vsub.s32 %v1853, %v1855
    %v1857 = vrot.slane %v1843, %v1856
    %v1858 = vcombine.low %v1387, %v1399
    %v1859 = vcombine.high %v1387, %v1399
    %v1861 = vunpack.c.l.s4 1983009808
    %v1862 = vunpack.c.0.s8 %v1861
    %v1863 = vlaneseq
    %v1864 = vshrl.u32 %v1863, 7
    %v1865 = vsub.s32 %v1862, %v1864
    %v1866 = vrot.slane %v1858, %v1865
    %v1868 = vunpack.c.l.s4 1983009808
    %v1869 = vunpack.c.0.s8 %v1868
    %v1870 = vlaneseq
    %v1871 = vshrl.u32 %v1870, 7
    %v1872 = vsub.s32 %v1869, %v1871
    %v1873 = vrot.slane %v1859, %v1872
    %v1874 = vcombine.low %v1818, %v1834
    %v1875 = vcombine.high %v1818, %v1834
    %v1877 = vunpack.c.l.s4 1934713408
    %v1878 = vunpack.c.0.s8 %v1877
    %v1879 = vlaneseq
    %v1880 = vshrl.u32 %v1879, 7
    %v1881 = vsub.s32 %v1878, %v1880
    %v1882 = vrot.slane %v1874, %v1881
    %v1884 = vunpack.c.l.s4 1934713408
    %v1885 = vunpack.c.0.s8 %v1884
    %v1886 = vlaneseq
    %v1887 = vshrl.u32 %v1886, 7
    %v1888 = vsub.s32 %v1885, %v1887
    %v1889 = vrot.slane %v1875, %v1888
    %v1890 = vcombine.low %v1825, %v1841
    %v1891 = vcombine.high %v1825, %v1841
    %v1893 = vunpack.c.l.s4 1934713408
    %v1894 = vunpack.c.0.s8 %v1893
    %v1895 = vlaneseq
    %v1896 = vshrl.u32 %v1895, 7
    %v1897 = vsub.s32 %v1894, %v1896
    %v1898 = vrot.slane %v1890, %v1897
    %v1900 = vunpack.c.l.s4 1934713408
    %v1901 = vunpack.c.0.s8 %v1900
    %v1902 = vlaneseq
    %v1903 = vshrl.u32 %v1902, 7
    %v1904 = vsub.s32 %v1901, %v1903
    %v1905 = vrot.slane %v1891, %v1904
    %v1906 = vcombine.low %v1850, %v1866
    %v1907 = vcombine.high %v1850, %v1866
    %v1909 = vunpack.c.l.s4 1934713408
    %v1910 = vunpack.c.0.s8 %v1909
    %v1911 = vlaneseq
    %v1912 = vshrl.u32 %v1911, 7
    %v1913 = vsub.s32 %v1910, %v1912
    %v1914 = vrot.slane %v1906, %v1913
    %v1916 = vunpack.c.l.s4 1934713408
    %v1917 = vunpack.c.0.s8 %v1916
    %v1918 = vlaneseq
    %v1919 = vshrl.u32 %v1918, 7
    %v1920 = vsub.s32 %v1917, %v1919
    %v1921 = vrot.slane %v1907, %v1920
    %v1922 = vcombine.low %v1857, %v1873
    %v1923 = vcombine.high %v1857, %v1873
    %v1925 = vunpack.c.l.s4 1934713408
    %v1926 = vunpack.c.0.s8 %v1925
    %v1927 = vlaneseq
    %v1928 = vshrl.u32 %v1927, 7
    %v1929 = vsub.s32 %v1926, %v1928
    %v1930 = vrot.slane %v1922, %v1929
    %v1932 = vunpack.c.l.s4 1934713408
    %v1933 = vunpack.c.0.s8 %v1932
    %v1934 = vlaneseq
    %v1935 = vshrl.u32 %v1934, 7
    %v1936 = vsub.s32 %v1933, %v1935
    %v1937 = vrot.slane %v1923, %v1936
    %v1938 = vcombine.low %v1882, %v1914
    %v1939 = vcombine.high %v1882, %v1914
    %v1940 = vcombine.low %v1889, %v1921
    %v1941 = vcombine.high %v1889, %v1921
    %v1942 = vcombine.low %v1898, %v1930
    %v1943 = vcombine.high %v1898, %v1930
    %v1944 = vcombine.low %v1905, %v1937
    %v1945 = vcombine.high %v1905, %v1937
    %v1946 = vmax.f32 %v1530, 0.0
    %v1947 = vmax.f32 %v1666, 0.0
    %v1948 = vmax.f32 %v1531, 0.0
    %v1949 = vmax.f32 %v1667, 0.0
    %v1950 = vmax.f32 %v1532, 0.0
    %v1951 = vmax.f32 %v1668, 0.0
    %v1952 = vmax.f32 %v1533, 0.0
    %v1953 = vmax.f32 %v1669, 0.0
    %v1954 = vmax.f32 %v1534, 0.0
    %v1955 = vmax.f32 %v1670, 0.0
    %v1956 = vmax.f32 %v1535, 0.0
    %v1957 = vmax.f32 %v1671, 0.0
    %v1958 = vmax.f32 %v1536, 0.0
    %v1959 = vmax.f32 %v1672, 0.0
    %v1960 = vmax.f32 %v1537, 0.0
    %v1961 = vmax.f32 %v1673, 0.0
    %v1962 = vmax.f32 %v1802, 0.0
    %v1963 = vmax.f32 %v1938, 0.0
    %v1964 = vmax.f32 %v1803, 0.0
    %v1965 = vmax.f32 %v1939, 0.0
    %v1966 = vmax.f32 %v1804, 0.0
    %v1967 = vmax.f32 %v1940, 0.0
    %v1968 = vmax.f32 %v1805, 0.0
    %v1969 = vmax.f32 %v1941, 0.0
    %v1970 = vmax.f32 %v1806, 0.0
    %v1971 = vmax.f32 %v1942, 0.0
    %v1972 = vmax.f32 %v1807, 0.0
    %v1973 = vmax.f32 %v1943, 0.0
    %v1974 = vmax.f32 %v1808, 0.0
    %v1975 = vmax.f32 %v1944, 0.0
    %v1976 = vmax.f32 %v1809, 0.0
    %v1977 = vmax.f32 %v1945, 0.0
    %v1978 = vld [vmem:[%s5] sm:$0xff]
    %v1979 = vld [vmem:[%s5 + $0x8] sm:$0xff]
    %v1980 = vld [vmem:[%s5 + $0x10] sm:$0xff]
    %v1981 = vld [vmem:[%s5 + $0x18] sm:$0xff]
    %v1982 = vld [vmem:[%s6] sm:$0x1]
    %v1984 = vlaneseq
    %v1985 = vshrl.u32 %v1984, 7
    %v1986 = vsub.s32 0, %v1985
    %v1987 = vrot.slane %v1982, %v1986
    %v1990 = vsel %vm1048, %v1946, 0
    %v1993 = vsel %vm1048, %v1947, 0
    %v1996 = vsel %vm1048, %v1948, 0
    %v1999 = vsel %vm1048, %v1949, 0
    %v2002 = vsel %vm1048, %v1950, 0
    %v2005 = vsel %vm1048, %v1951, 0
    %v2008 = vsel %vm1048, %v1952, 0
    %v2011 = vsel %vm1048, %v1953, 0
    %v2014 = vsel %vm1048, %v1954, 0
    %v2017 = vsel %vm1048, %v1955, 0
    %v2020 = vsel %vm1048, %v1956, 0
    %v2023 = vsel %vm1048, %v1957, 0
    %v2026 = vsel %vm1048, %v1958, 0
    %v2029 = vsel %vm1048, %v1959, 0
    %v2032 = vsel %vm1048, %v1960, 0
    %v2035 = vsel %vm1048, %v1961, 0
    %v2038 = vsel %vm1048, %v1962, 0
    %v2041 = vsel %vm1048, %v1963, 0
    %v2044 = vsel %vm1048, %v1964, 0
    %v2047 = vsel %vm1048, %v1965, 0
    %v2050 = vsel %vm1048, %v1966, 0
    %v2053 = vsel %vm1048, %v1967, 0
    %v2056 = vsel %vm1048, %v1968, 0
    %v2059 = vsel %vm1048, %v1969, 0
    %v2062 = vsel %vm1048, %v1970, 0
    %v2065 = vsel %vm1048, %v1971, 0
    %v2068 = vsel %vm1048, %v1972, 0
    %v2071 = vsel %vm1048, %v1973, 0
    %v2074 = vsel %vm1048, %v1974, 0
    %v2077 = vsel %vm1048, %v1975, 0
    %v2080 = vsel %vm1048, %v1976, 0
    %v2083 = vsel %vm1048, %v1977, 0
    %2085 = vmatprep.subr.mxu0 0.0
    %2086 = vmatpush1.msra.mxu0 %v1978
    %2087 = vmatprep.subr.mxu0 0.0
    %2088 = vmatpush1.msra.mxu0 %v1979
    %2089 = vmatprep.subr.mxu0 0.0
    %2090 = vmatpush1.msra.mxu0 %v1980
    %2091 = vmatprep.subr.mxu0 0.0
    %2092 = vmatpush1.msra.mxu0 %v1981
    %2093 = vmatprep.subr.mxu0 0.0
    %2094 = vmatpush1.msra.mxu0 0.0
    %2095 = vmatprep.subr.mxu0 0.0
    %2096 = vmatpush1.msra.mxu0 0.0
    %2097 = vmatprep.subr.mxu0 0.0
    %2098 = vmatpush1.msra.mxu0 0.0
    %2099 = vmatprep.subr.mxu0 0.0
    %2100 = vmatpush1.msra.mxu0 0.0
    %2101 = vmatprep.subr.mxu0 0.0
    %2102 = vmatpush1.msra.mxu0 0.0
    %2103 = vmatprep.subr.mxu0 0.0
    %2104 = vmatpush1.msra.mxu0 0.0
    %2105 = vmatprep.subr.mxu0 0.0
    %2106 = vmatpush1.msra.mxu0 0.0
    %2107 = vmatprep.subr.mxu0 0.0
    %2108 = vmatpush1.msra.mxu0 0.0
    %2109 = vmatprep.subr.mxu0 0.0
    %2110 = vmatpush1.msra.mxu0 0.0
    %2111 = vmatprep.subr.mxu0 0.0
    %2112 = vmatpush1.msra.mxu0 0.0
    %2113 = vmatprep.subr.mxu0 0.0
    %2114 = vmatpush1.msra.mxu0 0.0
    %2115 = vmatprep.subr.mxu0 0.0
    %2116 = vmatpush1.msra.mxu0 0.0
    %2117 = vmatprep.subr.mxu0 0.0
    %2118 = vmatpush1.msra.mxu0 0.0
    %2119 = vmatprep.subr.mxu0 0.0
    %2120 = vmatpush1.msra.mxu0 0.0
    %2121 = vmatprep.subr.mxu0 0.0
    %2122 = vmatpush1.msra.mxu0 0.0
    %2123 = vmatprep.subr.mxu0 0.0
    %2124 = vmatpush1.msra.mxu0 0.0
    %2125 = vmatprep.subr.mxu0 0.0
    %2126 = vmatpush1.msra.mxu0 0.0
    %2127 = vmatprep.subr.mxu0 0.0
    %2128 = vmatpush1.msra.mxu0 0.0
    %2129 = vmatprep.subr.mxu0 0.0
    %2130 = vmatpush1.msra.mxu0 0.0
    %2131 = vmatprep.subr.mxu0 0.0
    %2132 = vmatpush1.msra.mxu0 0.0
    %2133 = vmatprep.subr.mxu0 0.0
    %2134 = vmatpush1.msra.mxu0 0.0
    %2135 = vmatprep.subr.mxu0 0.0
    %2136 = vmatpush1.msra.mxu0 0.0
    %2137 = vmatprep.subr.mxu0 0.0
    %2138 = vmatpush1.msra.mxu0 0.0
    %2139 = vmatprep.subr.mxu0 0.0
    %2140 = vmatpush1.msra.mxu0 0.0
    %2141 = vmatprep.subr.mxu0 0.0
    %2142 = vmatpush1.msra.mxu0 0.0
    %2143 = vmatprep.subr.mxu0 0.0
    %2144 = vmatpush1.msra.mxu0 0.0
    %2145 = vmatprep.subr.mxu0 0.0
    %2146 = vmatpush1.msra.mxu0 0.0
    %2147 = vmatprep.subr.mxu0 0.0
    %2148 = vmatpush1.msra.mxu0 0.0
    %2149 = vmatprep.mubr.f32.mxu0 0.0
    %2150 = vmatmul.mubr.f32.gmra.mrb[0].mxu0 %v1990
    %v2151 = vpop.f32.mrb[0].mxu0
    %v2152 = vadd.f32 %v1987, %v2151
    %v2153 = vpop.f32.mrb[0].mxu0
    %2154 = vmatprep.mubr.f32.mxu0 0.0
    %2155 = vmatmul.mubr.f32.gmra.mrb[0].mxu0 %v1993
    %v2156 = vpop.f32.mrb[0].mxu0
    %v2157 = vadd.f32 %v1987, %v2156
    %v2158 = vpop.f32.mrb[0].mxu0
    %2159 = vmatprep.mubr.f32.mxu0 0.0
    %2160 = vmatmul.mubr.f32.gmra.mrb[0].mxu0 %v1996
    %v2161 = vpop.f32.mrb[0].mxu0
    %v2162 = vadd.f32 %v1987, %v2161
    %v2163 = vpop.f32.mrb[0].mxu0
    %2164 = vmatprep.mubr.f32.mxu0 0.0
    %2165 = vmatmul.mubr.f32.gmra.mrb[0].mxu0 %v1999
    %v2166 = vpop.f32.mrb[0].mxu0
    %v2167 = vadd.f32 %v1987, %v2166
    %v2168 = vpop.f32.mrb[0].mxu0
    %2169 = vmatprep.mubr.f32.mxu0 0.0
    %2170 = vmatmul.mubr.f32.gmra.mrb[0].mxu0 %v2002
    %v2171 = vpop.f32.mrb[0].mxu0
    %v2172 = vadd.f32 %v1987, %v2171
    %v2173 = vpop.f32.mrb[0].mxu0
    %2174 = vmatprep.mubr.f32.mxu0 0.0
    %2175 = vmatmul.mubr.f32.gmra.mrb[0].mxu0 %v2005
    %v2176 = vpop.f32.mrb[0].mxu0
    %v2177 = vadd.f32 %v1987, %v2176
    %v2178 = vpop.f32.mrb[0].mxu0
    %2179 = vmatprep.mubr.f32.mxu0 0.0
    %2180 = vmatmul.mubr.f32.gmra.mrb[0].mxu0 %v2008
    %v2181 = vpop.f32.mrb[0].mxu0
    %v2182 = vadd.f32 %v1987, %v2181
    %v2183 = vpop.f32.mrb[0].mxu0
    %2184 = vmatprep.mubr.f32.mxu0 0.0
    %2185 = vmatmul.mubr.f32.gmra.mrb[0].mxu0 %v2011
    %v2186 = vpop.f32.mrb[0].mxu0
    %v2187 = vadd.f32 %v1987, %v2186
    %v2188 = vpop.f32.mrb[0].mxu0
    %2189 = vmatprep.mubr.f32.mxu0 0.0
    %2190 = vmatmul.mubr.f32.gmra.mrb[0].mxu0 %v2014
    %v2191 = vpop.f32.mrb[0].mxu0
    %v2192 = vadd.f32 %v1987, %v2191
    %v2193 = vpop.f32.mrb[0].mxu0
    %2194 = vmatprep.mubr.f32.mxu0 0.0
    %2195 = vmatmul.mubr.f32.gmra.mrb[0].mxu0 %v2017
    %v2196 = vpop.f32.mrb[0].mxu0
    %v2197 = vadd.f32 %v1987, %v2196
    %v2198 = vpop.f32.mrb[0].mxu0
    %2199 = vmatprep.mubr.f32.mxu0 0.0
    %2200 = vmatmul.mubr.f32.gmra.mrb[0].mxu0 %v2020
    %v2201 = vpop.f32.mrb[0].mxu0
    %v2202 = vadd.f32 %v1987, %v2201
    %v2203 = vpop.f32.mrb[0].mxu0
    %2204 = vmatprep.mubr.f32.mxu0 0.0
    %2205 = vmatmul.mubr.f32.gmra.mrb[0].mxu0 %v2023
    %v2206 = vpop.f32.mrb[0].mxu0
    %v2207 = vadd.f32 %v1987, %v2206
    %v2208 = vpop.f32.mrb[0].mxu0
    %2209 = vmatprep.mubr.f32.mxu0 0.0
    %2210 = vmatmul.mubr.f32.gmra.mrb[0].mxu0 %v2026
    %v2211 = vpop.f32.mrb[0].mxu0
    %v2212 = vadd.f32 %v1987, %v2211
    %v2213 = vpop.f32.mrb[0].mxu0
    %2214 = vmatprep.mubr.f32.mxu0 0.0
    %2215 = vmatmul.mubr.f32.gmra.mrb[0].mxu0 %v2029
    %v2216 = vpop.f32.mrb[0].mxu0
    %v2217 = vadd.f32 %v1987, %v2216
    %v2218 = vpop.f32.mrb[0].mxu0
    %2219 = vmatprep.mubr.f32.mxu0 0.0
    %2220 = vmatmul.mubr.f32.gmra.mrb[0].mxu0 %v2032
    %v2221 = vpop.f32.mrb[0].mxu0
    %v2222 = vadd.f32 %v1987, %v2221
    %v2223 = vpop.f32.mrb[0].mxu0
    %2224 = vmatprep.mubr.f32.mxu0 0.0
    %2225 = vmatmul.mubr.f32.gmra.mrb[0].mxu0 %v2035
    %v2226 = vpop.f32.mrb[0].mxu0
    %v2227 = vadd.f32 %v1987, %v2226
    %v2228 = vpop.f32.mrb[0].mxu0
    %2229 = vmatprep.mubr.f32.mxu0 0.0
    %2230 = vmatmul.mubr.f32.gmra.mrb[0].mxu0 %v2038
    %v2231 = vpop.f32.mrb[0].mxu0
    %v2232 = vadd.f32 %v1987, %v2231
    %v2233 = vpop.f32.mrb[0].mxu0
    %2234 = vmatprep.mubr.f32.mxu0 0.0
    %2235 = vmatmul.mubr.f32.gmra.mrb[0].mxu0 %v2041
    %v2236 = vpop.f32.mrb[0].mxu0
    %v2237 = vadd.f32 %v1987, %v2236
    %v2238 = vpop.f32.mrb[0].mxu0
    %2239 = vmatprep.mubr.f32.mxu0 0.0
    %2240 = vmatmul.mubr.f32.gmra.mrb[0].mxu0 %v2044
    %v2241 = vpop.f32.mrb[0].mxu0
    %v2242 = vadd.f32 %v1987, %v2241
    %v2243 = vpop.f32.mrb[0].mxu0
    %2244 = vmatprep.mubr.f32.mxu0 0.0
    %2245 = vmatmul.mubr.f32.gmra.mrb[0].mxu0 %v2047
    %v2246 = vpop.f32.mrb[0].mxu0
    %v2247 = vadd.f32 %v1987, %v2246
    %v2248 = vpop.f32.mrb[0].mxu0
    %2249 = vmatprep.mubr.f32.mxu0 0.0
    %2250 = vmatmul.mubr.f32.gmra.mrb[0].mxu0 %v2050
    %v2251 = vpop.f32.mrb[0].mxu0
    %v2252 = vadd.f32 %v1987, %v2251
    %v2253 = vpop.f32.mrb[0].mxu0
    %2254 = vmatprep.mubr.f32.mxu0 0.0
    %2255 = vmatmul.mubr.f32.gmra.mrb[0].mxu0 %v2053
    %v2256 = vpop.f32.mrb[0].mxu0
    %v2257 = vadd.f32 %v1987, %v2256
    %v2258 = vpop.f32.mrb[0].mxu0
    %2259 = vmatprep.mubr.f32.mxu0 0.0
    %2260 = vmatmul.mubr.f32.gmra.mrb[0].mxu0 %v2056
    %v2261 = vpop.f32.mrb[0].mxu0
    %v2262 = vadd.f32 %v1987, %v2261
    %v2263 = vpop.f32.mrb[0].mxu0
    %2264 = vmatprep.mubr.f32.mxu0 0.0
    %2265 = vmatmul.mubr.f32.gmra.mrb[0].mxu0 %v2059
    %v2266 = vpop.f32.mrb[0].mxu0
    %v2267 = vadd.f32 %v1987, %v2266
    %v2268 = vpop.f32.mrb[0].mxu0
    %2269 = vmatprep.mubr.f32.mxu0 0.0
    %2270 = vmatmul.mubr.f32.gmra.mrb[0].mxu0 %v2062
    %v2271 = vpop.f32.mrb[0].mxu0
    %v2272 = vadd.f32 %v1987, %v2271
    %v2273 = vpop.f32.mrb[0].mxu0
    %2274 = vmatprep.mubr.f32.mxu0 0.0
    %2275 = vmatmul.mubr.f32.gmra.mrb[0].mxu0 %v2065
    %v2276 = vpop.f32.mrb[0].mxu0
    %v2277 = vadd.f32 %v1987, %v2276
    %v2278 = vpop.f32.mrb[0].mxu0
    %2279 = vmatprep.mubr.f32.mxu0 0.0
    %2280 = vmatmul.mubr.f32.gmra.mrb[0].mxu0 %v2068
    %v2281 = vpop.f32.mrb[0].mxu0
    %v2282 = vadd.f32 %v1987, %v2281
    %v2283 = vpop.f32.mrb[0].mxu0
    %2284 = vmatprep.mubr.f32.mxu0 0.0
    %2285 = vmatmul.mubr.f32.gmra.mrb[0].mxu0 %v2071
    %v2286 = vpop.f32.mrb[0].mxu0
    %v2287 = vadd.f32 %v1987, %v2286
    %v2288 = vpop.f32.mrb[0].mxu0
    %2289 = vmatprep.mubr.f32.mxu0 0.0
    %2290 = vmatmul.mubr.f32.gmra.mrb[0].mxu0 %v2074
    %v2291 = vpop.f32.mrb[0].mxu0
    %v2292 = vadd.f32 %v1987, %v2291
    %v2293 = vpop.f32.mrb[0].mxu0
    %2294 = vmatprep.mubr.f32.mxu0 0.0
    %2295 = vmatmul.mubr.f32.gmra.mrb[0].mxu0 %v2077
    %v2296 = vpop.f32.mrb[0].mxu0
    %v2297 = vadd.f32 %v1987, %v2296
    %v2298 = vpop.f32.mrb[0].mxu0
    %2299 = vmatprep.mubr.f32.mxu0 0.0
    %2300 = vmatmul.mubr.f32.gmra.mrb[0].mxu0 %v2080
    %v2301 = vpop.f32.mrb[0].mxu0
    %v2302 = vadd.f32 %v1987, %v2301
    %v2303 = vpop.f32.mrb[0].mxu0
    %2304 = vmatprep.mubr.f32.mxu0 0.0
    %2305 = vmatmul.mubr.f32.gmra.mrb[0].mxu0 %v2083
    %v2306 = vpop.f32.mrb[0].mxu0
    %v2307 = vadd.f32 %v1987, %v2306
    %v2308 = vpop.f32.mrb[0].mxu0
    %2309 = vdwg.mxu0
    %v2310 = vmax.f32 %v2152, 0.0
    %v2311 = vmax.f32 %v2157, 0.0
    %v2312 = vmax.f32 %v2162, 0.0
    %v2313 = vmax.f32 %v2167, 0.0
    %v2314 = vmax.f32 %v2172, 0.0
    %v2315 = vmax.f32 %v2177, 0.0
    %v2316 = vmax.f32 %v2182, 0.0
    %v2317 = vmax.f32 %v2187, 0.0
    %v2318 = vmax.f32 %v2192, 0.0
    %v2319 = vmax.f32 %v2197, 0.0
    %v2320 = vmax.f32 %v2202, 0.0
    %v2321 = vmax.f32 %v2207, 0.0
    %v2322 = vmax.f32 %v2212, 0.0
    %v2323 = vmax.f32 %v2217, 0.0
    %v2324 = vmax.f32 %v2222, 0.0
    %v2325 = vmax.f32 %v2227, 0.0
    %v2326 = vmax.f32 %v2232, 0.0
    %v2327 = vmax.f32 %v2237, 0.0
    %v2328 = vmax.f32 %v2242, 0.0
    %v2329 = vmax.f32 %v2247, 0.0
    %v2330 = vmax.f32 %v2252, 0.0
    %v2331 = vmax.f32 %v2257, 0.0
    %v2332 = vmax.f32 %v2262, 0.0
    %v2333 = vmax.f32 %v2267, 0.0
    %v2334 = vmax.f32 %v2272, 0.0
    %v2335 = vmax.f32 %v2277, 0.0
    %v2336 = vmax.f32 %v2282, 0.0
    %v2337 = vmax.f32 %v2287, 0.0
    %v2338 = vmax.f32 %v2292, 0.0
    %v2339 = vmax.f32 %v2297, 0.0
    %v2340 = vmax.f32 %v2302, 0.0
    %v2341 = vmax.f32 %v2307, 0.0
    %v2342 = vcombine.low %v2310, %v2314
    %v2343 = vcombine.high %v2310, %v2314
    %v2345 = vunpack.c.l.s4 1983009808
    %v2346 = vunpack.c.0.s8 %v2345
    %v2347 = vlaneseq
    %v2348 = vshrl.u32 %v2347, 7
    %v2349 = vsub.s32 %v2346, %v2348
    %v2350 = vrot.slane %v2342, %v2349
    %v2352 = vunpack.c.l.s4 1983009808
    %v2353 = vunpack.c.0.s8 %v2352
    %v2354 = vlaneseq
    %v2355 = vshrl.u32 %v2354, 7
    %v2356 = vsub.s32 %v2353, %v2355
    %v2357 = vrot.slane %v2343, %v2356
    %v2358 = vcombine.low %v2312, %v2316
    %v2359 = vcombine.high %v2312, %v2316
    %v2361 = vunpack.c.l.s4 1983009808
    %v2362 = vunpack.c.0.s8 %v2361
    %v2363 = vlaneseq
    %v2364 = vshrl.u32 %v2363, 7
    %v2365 = vsub.s32 %v2362, %v2364
    %v2366 = vrot.slane %v2358, %v2365
    %v2368 = vunpack.c.l.s4 1983009808
    %v2369 = vunpack.c.0.s8 %v2368
    %v2370 = vlaneseq
    %v2371 = vshrl.u32 %v2370, 7
    %v2372 = vsub.s32 %v2369, %v2371
    %v2373 = vrot.slane %v2359, %v2372
    %v2374 = vcombine.low %v2318, %v2322
    %v2375 = vcombine.high %v2318, %v2322
    %v2377 = vunpack.c.l.s4 1983009808
    %v2378 = vunpack.c.0.s8 %v2377
    %v2379 = vlaneseq
    %v2380 = vshrl.u32 %v2379, 7
    %v2381 = vsub.s32 %v2378, %v2380
    %v2382 = vrot.slane %v2374, %v2381
    %v2384 = vunpack.c.l.s4 1983009808
    %v2385 = vunpack.c.0.s8 %v2384
    %v2386 = vlaneseq
    %v2387 = vshrl.u32 %v2386, 7
    %v2388 = vsub.s32 %v2385, %v2387
    %v2389 = vrot.slane %v2375, %v2388
    %v2390 = vcombine.low %v2320, %v2324
    %v2391 = vcombine.high %v2320, %v2324
    %v2393 = vunpack.c.l.s4 1983009808
    %v2394 = vunpack.c.0.s8 %v2393
    %v2395 = vlaneseq
    %v2396 = vshrl.u32 %v2395, 7
    %v2397 = vsub.s32 %v2394, %v2396
    %v2398 = vrot.slane %v2390, %v2397
    %v2400 = vunpack.c.l.s4 1983009808
    %v2401 = vunpack.c.0.s8 %v2400
    %v2402 = vlaneseq
    %v2403 = vshrl.u32 %v2402, 7
    %v2404 = vsub.s32 %v2401, %v2403
    %v2405 = vrot.slane %v2391, %v2404
    %v2406 = vcombine.low %v2350, %v2366
    %v2407 = vcombine.high %v2350, %v2366
    %v2409 = vunpack.c.l.s4 1934713408
    %v2410 = vunpack.c.0.s8 %v2409
    %v2411 = vlaneseq
    %v2412 = vshrl.u32 %v2411, 7
    %v2413 = vsub.s32 %v2410, %v2412
    %v2414 = vrot.slane %v2406, %v2413
    %v2416 = vunpack.c.l.s4 1934713408
    %v2417 = vunpack.c.0.s8 %v2416
    %v2418 = vlaneseq
    %v2419 = vshrl.u32 %v2418, 7
    %v2420 = vsub.s32 %v2417, %v2419
    %v2421 = vrot.slane %v2407, %v2420
    %v2422 = vcombine.low %v2357, %v2373
    %v2423 = vcombine.high %v2357, %v2373
    %v2425 = vunpack.c.l.s4 1934713408
    %v2426 = vunpack.c.0.s8 %v2425
    %v2427 = vlaneseq
    %v2428 = vshrl.u32 %v2427, 7
    %v2429 = vsub.s32 %v2426, %v2428
    %v2430 = vrot.slane %v2422, %v2429
    %v2432 = vunpack.c.l.s4 1934713408
    %v2433 = vunpack.c.0.s8 %v2432
    %v2434 = vlaneseq
    %v2435 = vshrl.u32 %v2434, 7
    %v2436 = vsub.s32 %v2433, %v2435
    %v2437 = vrot.slane %v2423, %v2436
    %v2438 = vcombine.low %v2382, %v2398
    %v2439 = vcombine.high %v2382, %v2398
    %v2441 = vunpack.c.l.s4 1934713408
    %v2442 = vunpack.c.0.s8 %v2441
    %v2443 = vlaneseq
    %v2444 = vshrl.u32 %v2443, 7
    %v2445 = vsub.s32 %v2442, %v2444
    %v2446 = vrot.slane %v2438, %v2445
    %v2448 = vunpack.c.l.s4 1934713408
    %v2449 = vunpack.c.0.s8 %v2448
    %v2450 = vlaneseq
    %v2451 = vshrl.u32 %v2450, 7
    %v2452 = vsub.s32 %v2449, %v2451
    %v2453 = vrot.slane %v2439, %v2452
    %v2454 = vcombine.low %v2389, %v2405
    %v2455 = vcombine.high %v2389, %v2405
    %v2457 = vunpack.c.l.s4 1934713408
    %v2458 = vunpack.c.0.s8 %v2457
    %v2459 = vlaneseq
    %v2460 = vshrl.u32 %v2459, 7
    %v2461 = vsub.s32 %v2458, %v2460
    %v2462 = vrot.slane %v2454, %v2461
    %v2464 = vunpack.c.l.s4 1934713408
    %v2465 = vunpack.c.0.s8 %v2464
    %v2466 = vlaneseq
    %v2467 = vshrl.u32 %v2466, 7
    %v2468 = vsub.s32 %v2465, %v2467
    %v2469 = vrot.slane %v2455, %v2468
    %v2470 = vcombine.low %v2414, %v2446
    %v2471 = vcombine.high %v2414, %v2446
    %v2472 = vcombine.low %v2421, %v2453
    %v2473 = vcombine.high %v2421, %v2453
    %v2474 = vcombine.low %v2430, %v2462
    %v2475 = vcombine.high %v2430, %v2462
    %v2476 = vcombine.low %v2437, %v2469
    %v2477 = vcombine.high %v2437, %v2469
    %v2478 = vcombine.low %v2326, %v2330
    %v2479 = vcombine.high %v2326, %v2330
    %v2481 = vunpack.c.l.s4 1983009808
    %v2482 = vunpack.c.0.s8 %v2481
    %v2483 = vlaneseq
    %v2484 = vshrl.u32 %v2483, 7
    %v2485 = vsub.s32 %v2482, %v2484
    %v2486 = vrot.slane %v2478, %v2485
    %v2488 = vunpack.c.l.s4 1983009808
    %v2489 = vunpack.c.0.s8 %v2488
    %v2490 = vlaneseq
    %v2491 = vshrl.u32 %v2490, 7
    %v2492 = vsub.s32 %v2489, %v2491
    %v2493 = vrot.slane %v2479, %v2492
    %v2494 = vcombine.low %v2328, %v2332
    %v2495 = vcombine.high %v2328, %v2332
    %v2497 = vunpack.c.l.s4 1983009808
    %v2498 = vunpack.c.0.s8 %v2497
    %v2499 = vlaneseq
    %v2500 = vshrl.u32 %v2499, 7
    %v2501 = vsub.s32 %v2498, %v2500
    %v2502 = vrot.slane %v2494, %v2501
    %v2504 = vunpack.c.l.s4 1983009808
    %v2505 = vunpack.c.0.s8 %v2504
    %v2506 = vlaneseq
    %v2507 = vshrl.u32 %v2506, 7
    %v2508 = vsub.s32 %v2505, %v2507
    %v2509 = vrot.slane %v2495, %v2508
    %v2510 = vcombine.low %v2334, %v2338
    %v2511 = vcombine.high %v2334, %v2338
    %v2513 = vunpack.c.l.s4 1983009808
    %v2514 = vunpack.c.0.s8 %v2513
    %v2515 = vlaneseq
    %v2516 = vshrl.u32 %v2515, 7
    %v2517 = vsub.s32 %v2514, %v2516
    %v2518 = vrot.slane %v2510, %v2517
    %v2520 = vunpack.c.l.s4 1983009808
    %v2521 = vunpack.c.0.s8 %v2520
    %v2522 = vlaneseq
    %v2523 = vshrl.u32 %v2522, 7
    %v2524 = vsub.s32 %v2521, %v2523
    %v2525 = vrot.slane %v2511, %v2524
    %v2526 = vcombine.low %v2336, %v2340
    %v2527 = vcombine.high %v2336, %v2340
    %v2529 = vunpack.c.l.s4 1983009808
    %v2530 = vunpack.c.0.s8 %v2529
    %v2531 = vlaneseq
    %v2532 = vshrl.u32 %v2531, 7
    %v2533 = vsub.s32 %v2530, %v2532
    %v2534 = vrot.slane %v2526, %v2533
    %v2536 = vunpack.c.l.s4 1983009808
    %v2537 = vunpack.c.0.s8 %v2536
    %v2538 = vlaneseq
    %v2539 = vshrl.u32 %v2538, 7
    %v2540 = vsub.s32 %v2537, %v2539
    %v2541 = vrot.slane %v2527, %v2540
    %v2542 = vcombine.low %v2486, %v2502
    %v2543 = vcombine.high %v2486, %v2502
    %v2545 = vunpack.c.l.s4 1934713408
    %v2546 = vunpack.c.0.s8 %v2545
    %v2547 = vlaneseq
    %v2548 = vshrl.u32 %v2547, 7
    %v2549 = vsub.s32 %v2546, %v2548
    %v2550 = vrot.slane %v2542, %v2549
    %v2552 = vunpack.c.l.s4 1934713408
    %v2553 = vunpack.c.0.s8 %v2552
    %v2554 = vlaneseq
    %v2555 = vshrl.u32 %v2554, 7
    %v2556 = vsub.s32 %v2553, %v2555
    %v2557 = vrot.slane %v2543, %v2556
    %v2558 = vcombine.low %v2493, %v2509
    %v2559 = vcombine.high %v2493, %v2509
    %v2561 = vunpack.c.l.s4 1934713408
    %v2562 = vunpack.c.0.s8 %v2561
    %v2563 = vlaneseq
    %v2564 = vshrl.u32 %v2563, 7
    %v2565 = vsub.s32 %v2562, %v2564
    %v2566 = vrot.slane %v2558, %v2565
    %v2568 = vunpack.c.l.s4 1934713408
    %v2569 = vunpack.c.0.s8 %v2568
    %v2570 = vlaneseq
    %v2571 = vshrl.u32 %v2570, 7
    %v2572 = vsub.s32 %v2569, %v2571
    %v2573 = vrot.slane %v2559, %v2572
    %v2574 = vcombine.low %v2518, %v2534
    %v2575 = vcombine.high %v2518, %v2534
    %v2577 = vunpack.c.l.s4 1934713408
    %v2578 = vunpack.c.0.s8 %v2577
    %v2579 = vlaneseq
    %v2580 = vshrl.u32 %v2579, 7
    %v2581 = vsub.s32 %v2578, %v2580
    %v2582 = vrot.slane %v2574, %v2581
    %v2584 = vunpack.c.l.s4 1934713408
    %v2585 = vunpack.c.0.s8 %v2584
    %v2586 = vlaneseq
    %v2587 = vshrl.u32 %v2586, 7
    %v2588 = vsub.s32 %v2585, %v2587
    %v2589 = vrot.slane %v2575, %v2588
    %v2590 = vcombine.low %v2525, %v2541
    %v2591 = vcombine.high %v2525, %v2541
    %v2593 = vunpack.c.l.s4 1934713408
    %v2594 = vunpack.c.0.s8 %v2593
    %v2595 = vlaneseq
    %v2596 = vshrl.u32 %v2595, 7
    %v2597 = vsub.s32 %v2594, %v2596
    %v2598 = vrot.slane %v2590, %v2597
    %v2600 = vunpack.c.l.s4 1934713408
    %v2601 = vunpack.c.0.s8 %v2600
    %v2602 = vlaneseq
    %v2603 = vshrl.u32 %v2602, 7
    %v2604 = vsub.s32 %v2601, %v2603
    %v2605 = vrot.slane %v2591, %v2604
    %v2606 = vcombine.low %v2550, %v2582
    %v2607 = vcombine.high %v2550, %v2582
    %v2608 = vcombine.low %v2557, %v2589
    %v2609 = vcombine.high %v2557, %v2589
    %v2610 = vcombine.low %v2566, %v2598
    %v2611 = vcombine.high %v2566, %v2598
    %v2612 = vcombine.low %v2573, %v2605
    %v2613 = vcombine.high %v2573, %v2605
    %v2614 = vcombine.low %v2311, %v2315
    %v2615 = vcombine.high %v2311, %v2315
    %v2617 = vunpack.c.l.s4 1983009808
    %v2618 = vunpack.c.0.s8 %v2617
    %v2619 = vlaneseq
    %v2620 = vshrl.u32 %v2619, 7
    %v2621 = vsub.s32 %v2618, %v2620
    %v2622 = vrot.slane %v2614, %v2621
    %v2624 = vunpack.c.l.s4 1983009808
    %v2625 = vunpack.c.0.s8 %v2624
    %v2626 = vlaneseq
    %v2627 = vshrl.u32 %v2626, 7
    %v2628 = vsub.s32 %v2625, %v2627
    %v2629 = vrot.slane %v2615, %v2628
    %v2630 = vcombine.low %v2313, %v2317
    %v2631 = vcombine.high %v2313, %v2317
    %v2633 = vunpack.c.l.s4 1983009808
    %v2634 = vunpack.c.0.s8 %v2633
    %v2635 = vlaneseq
    %v2636 = vshrl.u32 %v2635, 7
    %v2637 = vsub.s32 %v2634, %v2636
    %v2638 = vrot.slane %v2630, %v2637
    %v2640 = vunpack.c.l.s4 1983009808
    %v2641 = vunpack.c.0.s8 %v2640
    %v2642 = vlaneseq
    %v2643 = vshrl.u32 %v2642, 7
    %v2644 = vsub.s32 %v2641, %v2643
    %v2645 = vrot.slane %v2631, %v2644
    %v2646 = vcombine.low %v2319, %v2323
    %v2647 = vcombine.high %v2319, %v2323
    %v2649 = vunpack.c.l.s4 1983009808
    %v2650 = vunpack.c.0.s8 %v2649
    %v2651 = vlaneseq
    %v2652 = vshrl.u32 %v2651, 7
    %v2653 = vsub.s32 %v2650, %v2652
    %v2654 = vrot.slane %v2646, %v2653
    %v2656 = vunpack.c.l.s4 1983009808
    %v2657 = vunpack.c.0.s8 %v2656
    %v2658 = vlaneseq
    %v2659 = vshrl.u32 %v2658, 7
    %v2660 = vsub.s32 %v2657, %v2659
    %v2661 = vrot.slane %v2647, %v2660
    %v2662 = vcombine.low %v2321, %v2325
    %v2663 = vcombine.high %v2321, %v2325
    %v2665 = vunpack.c.l.s4 1983009808
    %v2666 = vunpack.c.0.s8 %v2665
    %v2667 = vlaneseq
    %v2668 = vshrl.u32 %v2667, 7
    %v2669 = vsub.s32 %v2666, %v2668
    %v2670 = vrot.slane %v2662, %v2669
    %v2672 = vunpack.c.l.s4 1983009808
    %v2673 = vunpack.c.0.s8 %v2672
    %v2674 = vlaneseq
    %v2675 = vshrl.u32 %v2674, 7
    %v2676 = vsub.s32 %v2673, %v2675
    %v2677 = vrot.slane %v2663, %v2676
    %v2678 = vcombine.low %v2622, %v2638
    %v2679 = vcombine.high %v2622, %v2638
    %v2681 = vunpack.c.l.s4 1934713408
    %v2682 = vunpack.c.0.s8 %v2681
    %v2683 = vlaneseq
    %v2684 = vshrl.u32 %v2683, 7
    %v2685 = vsub.s32 %v2682, %v2684
    %v2686 = vrot.slane %v2678, %v2685
    %v2688 = vunpack.c.l.s4 1934713408
    %v2689 = vunpack.c.0.s8 %v2688
    %v2690 = vlaneseq
    %v2691 = vshrl.u32 %v2690, 7
    %v2692 = vsub.s32 %v2689, %v2691
    %v2693 = vrot.slane %v2679, %v2692
    %v2694 = vcombine.low %v2629, %v2645
    %v2695 = vcombine.high %v2629, %v2645
    %v2697 = vunpack.c.l.s4 1934713408
    %v2698 = vunpack.c.0.s8 %v2697
    %v2699 = vlaneseq
    %v2700 = vshrl.u32 %v2699, 7
    %v2701 = vsub.s32 %v2698, %v2700
    %v2702 = vrot.slane %v2694, %v2701
    %v2704 = vunpack.c.l.s4 1934713408
    %v2705 = vunpack.c.0.s8 %v2704
    %v2706 = vlaneseq
    %v2707 = vshrl.u32 %v2706, 7
    %v2708 = vsub.s32 %v2705, %v2707
    %v2709 = vrot.slane %v2695, %v2708
    %v2710 = vcombine.low %v2654, %v2670
    %v2711 = vcombine.high %v2654, %v2670
    %v2713 = vunpack.c.l.s4 1934713408
    %v2714 = vunpack.c.0.s8 %v2713
    %v2715 = vlaneseq
    %v2716 = vshrl.u32 %v2715, 7
    %v2717 = vsub.s32 %v2714, %v2716
    %v2718 = vrot.slane %v2710, %v2717
    %v2720 = vunpack.c.l.s4 1934713408
    %v2721 = vunpack.c.0.s8 %v2720
    %v2722 = vlaneseq
    %v2723 = vshrl.u32 %v2722, 7
    %v2724 = vsub.s32 %v2721, %v2723
    %v2725 = vrot.slane %v2711, %v2724
    %v2726 = vcombine.low %v2661, %v2677
    %v2727 = vcombine.high %v2661, %v2677
    %v2729 = vunpack.c.l.s4 1934713408
    %v2730 = vunpack.c.0.s8 %v2729
    %v2731 = vlaneseq
    %v2732 = vshrl.u32 %v2731, 7
    %v2733 = vsub.s32 %v2730, %v2732
    %v2734 = vrot.slane %v2726, %v2733
    %v2736 = vunpack.c.l.s4 1934713408
    %v2737 = vunpack.c.0.s8 %v2736
    %v2738 = vlaneseq
    %v2739 = vshrl.u32 %v2738, 7
    %v2740 = vsub.s32 %v2737, %v2739
    %v2741 = vrot.slane %v2727, %v2740
    %v2742 = vcombine.low %v2686, %v2718
    %v2743 = vcombine.high %v2686, %v2718
    %v2744 = vcombine.low %v2693, %v2725
    %v2745 = vcombine.high %v2693, %v2725
    %v2746 = vcombine.low %v2702, %v2734
    %v2747 = vcombine.high %v2702, %v2734
    %v2748 = vcombine.low %v2709, %v2741
    %v2749 = vcombine.high %v2709, %v2741
    %v2750 = vcombine.low %v2327, %v2331
    %v2751 = vcombine.high %v2327, %v2331
    %v2753 = vunpack.c.l.s4 1983009808
    %v2754 = vunpack.c.0.s8 %v2753
    %v2755 = vlaneseq
    %v2756 = vshrl.u32 %v2755, 7
    %v2757 = vsub.s32 %v2754, %v2756
    %v2758 = vrot.slane %v2750, %v2757
    %v2760 = vunpack.c.l.s4 1983009808
    %v2761 = vunpack.c.0.s8 %v2760
    %v2762 = vlaneseq
    %v2763 = vshrl.u32 %v2762, 7
    %v2764 = vsub.s32 %v2761, %v2763
    %v2765 = vrot.slane %v2751, %v2764
    %v2766 = vcombine.low %v2329, %v2333
    %v2767 = vcombine.high %v2329, %v2333
    %v2769 = vunpack.c.l.s4 1983009808
    %v2770 = vunpack.c.0.s8 %v2769
    %v2771 = vlaneseq
    %v2772 = vshrl.u32 %v2771, 7
    %v2773 = vsub.s32 %v2770, %v2772
    %v2774 = vrot.slane %v2766, %v2773
    %v2776 = vunpack.c.l.s4 1983009808
    %v2777 = vunpack.c.0.s8 %v2776
    %v2778 = vlaneseq
    %v2779 = vshrl.u32 %v2778, 7
    %v2780 = vsub.s32 %v2777, %v2779
    %v2781 = vrot.slane %v2767, %v2780
    %v2782 = vcombine.low %v2335, %v2339
    %v2783 = vcombine.high %v2335, %v2339
    %v2785 = vunpack.c.l.s4 1983009808
    %v2786 = vunpack.c.0.s8 %v2785
    %v2787 = vlaneseq
    %v2788 = vshrl.u32 %v2787, 7
    %v2789 = vsub.s32 %v2786, %v2788
    %v2790 = vrot.slane %v2782, %v2789
    %v2792 = vunpack.c.l.s4 1983009808
    %v2793 = vunpack.c.0.s8 %v2792
    %v2794 = vlaneseq
    %v2795 = vshrl.u32 %v2794, 7
    %v2796 = vsub.s32 %v2793, %v2795
    %v2797 = vrot.slane %v2783, %v2796
    %v2798 = vcombine.low %v2337, %v2341
    %v2799 = vcombine.high %v2337, %v2341
    %v2801 = vunpack.c.l.s4 1983009808
    %v2802 = vunpack.c.0.s8 %v2801
    %v2803 = vlaneseq
    %v2804 = vshrl.u32 %v2803, 7
    %v2805 = vsub.s32 %v2802, %v2804
    %v2806 = vrot.slane %v2798, %v2805
    %v2808 = vunpack.c.l.s4 1983009808
    %v2809 = vunpack.c.0.s8 %v2808
    %v2810 = vlaneseq
    %v2811 = vshrl.u32 %v2810, 7
    %v2812 = vsub.s32 %v2809, %v2811
    %v2813 = vrot.slane %v2799, %v2812
    %v2814 = vcombine.low %v2758, %v2774
    %v2815 = vcombine.high %v2758, %v2774
    %v2817 = vunpack.c.l.s4 1934713408
    %v2818 = vunpack.c.0.s8 %v2817
    %v2819 = vlaneseq
    %v2820 = vshrl.u32 %v2819, 7
    %v2821 = vsub.s32 %v2818, %v2820
    %v2822 = vrot.slane %v2814, %v2821
    %v2824 = vunpack.c.l.s4 1934713408
    %v2825 = vunpack.c.0.s8 %v2824
    %v2826 = vlaneseq
    %v2827 = vshrl.u32 %v2826, 7
    %v2828 = vsub.s32 %v2825, %v2827
    %v2829 = vrot.slane %v2815, %v2828
    %v2830 = vcombine.low %v2765, %v2781
    %v2831 = vcombine.high %v2765, %v2781
    %v2833 = vunpack.c.l.s4 1934713408
    %v2834 = vunpack.c.0.s8 %v2833
    %v2835 = vlaneseq
    %v2836 = vshrl.u32 %v2835, 7
    %v2837 = vsub.s32 %v2834, %v2836
    %v2838 = vrot.slane %v2830, %v2837
    %v2840 = vunpack.c.l.s4 1934713408
    %v2841 = vunpack.c.0.s8 %v2840
    %v2842 = vlaneseq
    %v2843 = vshrl.u32 %v2842, 7
    %v2844 = vsub.s32 %v2841, %v2843
    %v2845 = vrot.slane %v2831, %v2844
    %v2846 = vcombine.low %v2790, %v2806
    %v2847 = vcombine.high %v2790, %v2806
    %v2849 = vunpack.c.l.s4 1934713408
    %v2850 = vunpack.c.0.s8 %v2849
    %v2851 = vlaneseq
    %v2852 = vshrl.u32 %v2851, 7
    %v2853 = vsub.s32 %v2850, %v2852
    %v2854 = vrot.slane %v2846, %v2853
    %v2856 = vunpack.c.l.s4 1934713408
    %v2857 = vunpack.c.0.s8 %v2856
    %v2858 = vlaneseq
    %v2859 = vshrl.u32 %v2858, 7
    %v2860 = vsub.s32 %v2857, %v2859
    %v2861 = vrot.slane %v2847, %v2860
    %v2862 = vcombine.low %v2797, %v2813
    %v2863 = vcombine.high %v2797, %v2813
    %v2865 = vunpack.c.l.s4 1934713408
    %v2866 = vunpack.c.0.s8 %v2865
    %v2867 = vlaneseq
    %v2868 = vshrl.u32 %v2867, 7
    %v2869 = vsub.s32 %v2866, %v2868
    %v2870 = vrot.slane %v2862, %v2869
    %v2872 = vunpack.c.l.s4 1934713408
    %v2873 = vunpack.c.0.s8 %v2872
    %v2874 = vlaneseq
    %v2875 = vshrl.u32 %v2874, 7
    %v2876 = vsub.s32 %v2873, %v2875
    %v2877 = vrot.slane %v2863, %v2876
    %v2878 = vcombine.low %v2822, %v2854
    %v2879 = vcombine.high %v2822, %v2854
    %v2880 = vcombine.low %v2829, %v2861
    %v2881 = vcombine.high %v2829, %v2861
    %v2882 = vcombine.low %v2838, %v2870
    %v2883 = vcombine.high %v2838, %v2870
    %v2884 = vcombine.low %v2845, %v2877
    %v2885 = vcombine.high %v2845, %v2877
    %v2886 = vcombine.low %v2470, %v2472
    %v2887 = vcombine.high %v2470, %v2472
    %v2889 = vunpack.c.l.s4 1983009808
    %v2890 = vunpack.c.0.s8 %v2889
    %v2891 = vlaneseq
    %v2892 = vshrl.u32 %v2891, 7
    %v2893 = vsub.s32 %v2890, %v2892
    %v2894 = vrot.slane %v2886, %v2893
    %v2896 = vunpack.c.l.s4 1983009808
    %v2897 = vunpack.c.0.s8 %v2896
    %v2898 = vlaneseq
    %v2899 = vshrl.u32 %v2898, 7
    %v2900 = vsub.s32 %v2897, %v2899
    %v2901 = vrot.slane %v2887, %v2900
    %v2902 = vcombine.low %v2471, %v2473
    %v2903 = vcombine.high %v2471, %v2473
    %v2905 = vunpack.c.l.s4 1983009808
    %v2906 = vunpack.c.0.s8 %v2905
    %v2907 = vlaneseq
    %v2908 = vshrl.u32 %v2907, 7
    %v2909 = vsub.s32 %v2906, %v2908
    %v2910 = vrot.slane %v2902, %v2909
    %v2912 = vunpack.c.l.s4 1983009808
    %v2913 = vunpack.c.0.s8 %v2912
    %v2914 = vlaneseq
    %v2915 = vshrl.u32 %v2914, 7
    %v2916 = vsub.s32 %v2913, %v2915
    %v2917 = vrot.slane %v2903, %v2916
    %v2918 = vcombine.low %v2474, %v2476
    %v2919 = vcombine.high %v2474, %v2476
    %v2921 = vunpack.c.l.s4 1983009808
    %v2922 = vunpack.c.0.s8 %v2921
    %v2923 = vlaneseq
    %v2924 = vshrl.u32 %v2923, 7
    %v2925 = vsub.s32 %v2922, %v2924
    %v2926 = vrot.slane %v2918, %v2925
    %v2928 = vunpack.c.l.s4 1983009808
    %v2929 = vunpack.c.0.s8 %v2928
    %v2930 = vlaneseq
    %v2931 = vshrl.u32 %v2930, 7
    %v2932 = vsub.s32 %v2929, %v2931
    %v2933 = vrot.slane %v2919, %v2932
    %v2934 = vcombine.low %v2475, %v2477
    %v2935 = vcombine.high %v2475, %v2477
    %v2937 = vunpack.c.l.s4 1983009808
    %v2938 = vunpack.c.0.s8 %v2937
    %v2939 = vlaneseq
    %v2940 = vshrl.u32 %v2939, 7
    %v2941 = vsub.s32 %v2938, %v2940
    %v2942 = vrot.slane %v2934, %v2941
    %v2944 = vunpack.c.l.s4 1983009808
    %v2945 = vunpack.c.0.s8 %v2944
    %v2946 = vlaneseq
    %v2947 = vshrl.u32 %v2946, 7
    %v2948 = vsub.s32 %v2945, %v2947
    %v2949 = vrot.slane %v2935, %v2948
    %v2950 = vcombine.low %v2894, %v2910
    %v2951 = vcombine.high %v2894, %v2910
    %v2953 = vunpack.c.l.s4 1934713408
    %v2954 = vunpack.c.0.s8 %v2953
    %v2955 = vlaneseq
    %v2956 = vshrl.u32 %v2955, 7
    %v2957 = vsub.s32 %v2954, %v2956
    %v2958 = vrot.slane %v2950, %v2957
    %v2960 = vunpack.c.l.s4 1934713408
    %v2961 = vunpack.c.0.s8 %v2960
    %v2962 = vlaneseq
    %v2963 = vshrl.u32 %v2962, 7
    %v2964 = vsub.s32 %v2961, %v2963
    %v2965 = vrot.slane %v2951, %v2964
    %v2966 = vcombine.low %v2901, %v2917
    %v2967 = vcombine.high %v2901, %v2917
    %v2969 = vunpack.c.l.s4 1934713408
    %v2970 = vunpack.c.0.s8 %v2969
    %v2971 = vlaneseq
    %v2972 = vshrl.u32 %v2971, 7
    %v2973 = vsub.s32 %v2970, %v2972
    %v2974 = vrot.slane %v2966, %v2973
    %v2976 = vunpack.c.l.s4 1934713408
    %v2977 = vunpack.c.0.s8 %v2976
    %v2978 = vlaneseq
    %v2979 = vshrl.u32 %v2978, 7
    %v2980 = vsub.s32 %v2977, %v2979
    %v2981 = vrot.slane %v2967, %v2980
    %v2982 = vcombine.low %v2926, %v2942
    %v2983 = vcombine.high %v2926, %v2942
    %v2985 = vunpack.c.l.s4 1934713408
    %v2986 = vunpack.c.0.s8 %v2985
    %v2987 = vlaneseq
    %v2988 = vshrl.u32 %v2987, 7
    %v2989 = vsub.s32 %v2986, %v2988
    %v2990 = vrot.slane %v2982, %v2989
    %v2992 = vunpack.c.l.s4 1934713408
    %v2993 = vunpack.c.0.s8 %v2992
    %v2994 = vlaneseq
    %v2995 = vshrl.u32 %v2994, 7
    %v2996 = vsub.s32 %v2993, %v2995
    %v2997 = vrot.slane %v2983, %v2996
    %v2998 = vcombine.low %v2933, %v2949
    %v2999 = vcombine.high %v2933, %v2949
    %v3001 = vunpack.c.l.s4 1934713408
    %v3002 = vunpack.c.0.s8 %v3001
    %v3003 = vlaneseq
    %v3004 = vshrl.u32 %v3003, 7
    %v3005 = vsub.s32 %v3002, %v3004
    %v3006 = vrot.slane %v2998, %v3005
    %v3008 = vunpack.c.l.s4 1934713408
    %v3009 = vunpack.c.0.s8 %v3008
    %v3010 = vlaneseq
    %v3011 = vshrl.u32 %v3010, 7
    %v3012 = vsub.s32 %v3009, %v3011
    %v3013 = vrot.slane %v2999, %v3012
    %v3014 = vcombine.low %v2958, %v2990
    %v3015 = vcombine.high %v2958, %v2990
    %v3016 = vcombine.low %v2965, %v2997
    %v3017 = vcombine.high %v2965, %v2997
    %v3018 = vcombine.low %v2974, %v3006
    %v3019 = vcombine.high %v2974, %v3006
    %v3020 = vcombine.low %v2981, %v3013
    %v3021 = vcombine.high %v2981, %v3013
    %v3022 = vcombine.low %v2606, %v2608
    %v3023 = vcombine.high %v2606, %v2608
    %v3025 = vunpack.c.l.s4 1983009808
    %v3026 = vunpack.c.0.s8 %v3025
    %v3027 = vlaneseq
    %v3028 = vshrl.u32 %v3027, 7
    %v3029 = vsub.s32 %v3026, %v3028
    %v3030 = vrot.slane %v3022, %v3029
    %v3032 = vunpack.c.l.s4 1983009808
    %v3033 = vunpack.c.0.s8 %v3032
    %v3034 = vlaneseq
    %v3035 = vshrl.u32 %v3034, 7
    %v3036 = vsub.s32 %v3033, %v3035
    %v3037 = vrot.slane %v3023, %v3036
    %v3038 = vcombine.low %v2607, %v2609
    %v3039 = vcombine.high %v2607, %v2609
    %v3041 = vunpack.c.l.s4 1983009808
    %v3042 = vunpack.c.0.s8 %v3041
    %v3043 = vlaneseq
    %v3044 = vshrl.u32 %v3043, 7
    %v3045 = vsub.s32 %v3042, %v3044
    %v3046 = vrot.slane %v3038, %v3045
    %v3048 = vunpack.c.l.s4 1983009808
    %v3049 = vunpack.c.0.s8 %v3048
    %v3050 = vlaneseq
    %v3051 = vshrl.u32 %v3050, 7
    %v3052 = vsub.s32 %v3049, %v3051
    %v3053 = vrot.slane %v3039, %v3052
    %v3054 = vcombine.low %v2610, %v2612
    %v3055 = vcombine.high %v2610, %v2612
    %v3057 = vunpack.c.l.s4 1983009808
    %v3058 = vunpack.c.0.s8 %v3057
    %v3059 = vlaneseq
    %v3060 = vshrl.u32 %v3059, 7
    %v3061 = vsub.s32 %v3058, %v3060
    %v3062 = vrot.slane %v3054, %v3061
    %v3064 = vunpack.c.l.s4 1983009808
    %v3065 = vunpack.c.0.s8 %v3064
    %v3066 = vlaneseq
    %v3067 = vshrl.u32 %v3066, 7
    %v3068 = vsub.s32 %v3065, %v3067
    %v3069 = vrot.slane %v3055, %v3068
    %v3070 = vcombine.low %v2611, %v2613
    %v3071 = vcombine.high %v2611, %v2613
    %v3073 = vunpack.c.l.s4 1983009808
    %v3074 = vunpack.c.0.s8 %v3073
    %v3075 = vlaneseq
    %v3076 = vshrl.u32 %v3075, 7
    %v3077 = vsub.s32 %v3074, %v3076
    %v3078 = vrot.slane %v3070, %v3077
    %v3080 = vunpack.c.l.s4 1983009808
    %v3081 = vunpack.c.0.s8 %v3080
    %v3082 = vlaneseq
    %v3083 = vshrl.u32 %v3082, 7
    %v3084 = vsub.s32 %v3081, %v3083
    %v3085 = vrot.slane %v3071, %v3084
    %v3086 = vcombine.low %v3030, %v3046
    %v3087 = vcombine.high %v3030, %v3046
    %v3089 = vunpack.c.l.s4 1934713408
    %v3090 = vunpack.c.0.s8 %v3089
    %v3091 = vlaneseq
    %v3092 = vshrl.u32 %v3091, 7
    %v3093 = vsub.s32 %v3090, %v3092
    %v3094 = vrot.slane %v3086, %v3093
    %v3096 = vunpack.c.l.s4 1934713408
    %v3097 = vunpack.c.0.s8 %v3096
    %v3098 = vlaneseq
    %v3099 = vshrl.u32 %v3098, 7
    %v3100 = vsub.s32 %v3097, %v3099
    %v3101 = vrot.slane %v3087, %v3100
    %v3102 = vcombine.low %v3037, %v3053
    %v3103 = vcombine.high %v3037, %v3053
    %v3105 = vunpack.c.l.s4 1934713408
    %v3106 = vunpack.c.0.s8 %v3105
    %v3107 = vlaneseq
    %v3108 = vshrl.u32 %v3107, 7
    %v3109 = vsub.s32 %v3106, %v3108
    %v3110 = vrot.slane %v3102, %v3109
    %v3112 = vunpack.c.l.s4 1934713408
    %v3113 = vunpack.c.0.s8 %v3112
    %v3114 = vlaneseq
    %v3115 = vshrl.u32 %v3114, 7
    %v3116 = vsub.s32 %v3113, %v3115
    %v3117 = vrot.slane %v3103, %v3116
    %v3118 = vcombine.low %v3062, %v3078
    %v3119 = vcombine.high %v3062, %v3078
    %v3121 = vunpack.c.l.s4 1934713408
    %v3122 = vunpack.c.0.s8 %v3121
    %v3123 = vlaneseq
    %v3124 = vshrl.u32 %v3123, 7
    %v3125 = vsub.s32 %v3122, %v3124
    %v3126 = vrot.slane %v3118, %v3125
    %v3128 = vunpack.c.l.s4 1934713408
    %v3129 = vunpack.c.0.s8 %v3128
    %v3130 = vlaneseq
    %v3131 = vshrl.u32 %v3130, 7
    %v3132 = vsub.s32 %v3129, %v3131
    %v3133 = vrot.slane %v3119, %v3132
    %v3134 = vcombine.low %v3069, %v3085
    %v3135 = vcombine.high %v3069, %v3085
    %v3137 = vunpack.c.l.s4 1934713408
    %v3138 = vunpack.c.0.s8 %v3137
    %v3139 = vlaneseq
    %v3140 = vshrl.u32 %v3139, 7
    %v3141 = vsub.s32 %v3138, %v3140
    %v3142 = vrot.slane %v3134, %v3141
    %v3144 = vunpack.c.l.s4 1934713408
    %v3145 = vunpack.c.0.s8 %v3144
    %v3146 = vlaneseq
    %v3147 = vshrl.u32 %v3146, 7
    %v3148 = vsub.s32 %v3145, %v3147
    %v3149 = vrot.slane %v3135, %v3148
    %v3150 = vcombine.low %v3094, %v3126
    %v3151 = vcombine.high %v3094, %v3126
    %v3152 = vcombine.low %v3101, %v3133
    %v3153 = vcombine.high %v3101, %v3133
    %v3154 = vcombine.low %v3110, %v3142
    %v3155 = vcombine.high %v3110, %v3142
    %v3156 = vcombine.low %v3117, %v3149
    %v3157 = vcombine.high %v3117, %v3149
    %v3158 = vcombine.low %v2742, %v2744
    %v3159 = vcombine.high %v2742, %v2744
    %v3161 = vunpack.c.l.s4 1983009808
    %v3162 = vunpack.c.0.s8 %v3161
    %v3163 = vlaneseq
    %v3164 = vshrl.u32 %v3163, 7
    %v3165 = vsub.s32 %v3162, %v3164
    %v3166 = vrot.slane %v3158, %v3165
    %v3168 = vunpack.c.l.s4 1983009808
    %v3169 = vunpack.c.0.s8 %v3168
    %v3170 = vlaneseq
    %v3171 = vshrl.u32 %v3170, 7
    %v3172 = vsub.s32 %v3169, %v3171
    %v3173 = vrot.slane %v3159, %v3172
    %v3174 = vcombine.low %v2743, %v2745
    %v3175 = vcombine.high %v2743, %v2745
    %v3177 = vunpack.c.l.s4 1983009808
    %v3178 = vunpack.c.0.s8 %v3177
    %v3179 = vlaneseq
    %v3180 = vshrl.u32 %v3179, 7
    %v3181 = vsub.s32 %v3178, %v3180
    %v3182 = vrot.slane %v3174, %v3181
    %v3184 = vunpack.c.l.s4 1983009808
    %v3185 = vunpack.c.0.s8 %v3184
    %v3186 = vlaneseq
    %v3187 = vshrl.u32 %v3186, 7
    %v3188 = vsub.s32 %v3185, %v3187
    %v3189 = vrot.slane %v3175, %v3188
    %v3190 = vcombine.low %v2746, %v2748
    %v3191 = vcombine.high %v2746, %v2748
    %v3193 = vunpack.c.l.s4 1983009808
    %v3194 = vunpack.c.0.s8 %v3193
    %v3195 = vlaneseq
    %v3196 = vshrl.u32 %v3195, 7
    %v3197 = vsub.s32 %v3194, %v3196
    %v3198 = vrot.slane %v3190, %v3197
    %v3200 = vunpack.c.l.s4 1983009808
    %v3201 = vunpack.c.0.s8 %v3200
    %v3202 = vlaneseq
    %v3203 = vshrl.u32 %v3202, 7
    %v3204 = vsub.s32 %v3201, %v3203
    %v3205 = vrot.slane %v3191, %v3204
    %v3206 = vcombine.low %v2747, %v2749
    %v3207 = vcombine.high %v2747, %v2749
    %v3209 = vunpack.c.l.s4 1983009808
    %v3210 = vunpack.c.0.s8 %v3209
    %v3211 = vlaneseq
    %v3212 = vshrl.u32 %v3211, 7
    %v3213 = vsub.s32 %v3210, %v3212
    %v3214 = vrot.slane %v3206, %v3213
    %v3216 = vunpack.c.l.s4 1983009808
    %v3217 = vunpack.c.0.s8 %v3216
    %v3218 = vlaneseq
    %v3219 = vshrl.u32 %v3218, 7
    %v3220 = vsub.s32 %v3217, %v3219
    %v3221 = vrot.slane %v3207, %v3220
    %v3222 = vcombine.low %v3166, %v3182
    %v3223 = vcombine.high %v3166, %v3182
    %v3225 = vunpack.c.l.s4 1934713408
    %v3226 = vunpack.c.0.s8 %v3225
    %v3227 = vlaneseq
    %v3228 = vshrl.u32 %v3227, 7
    %v3229 = vsub.s32 %v3226, %v3228
    %v3230 = vrot.slane %v3222, %v3229
    %v3232 = vunpack.c.l.s4 1934713408
    %v3233 = vunpack.c.0.s8 %v3232
    %v3234 = vlaneseq
    %v3235 = vshrl.u32 %v3234, 7
    %v3236 = vsub.s32 %v3233, %v3235
    %v3237 = vrot.slane %v3223, %v3236
    %v3238 = vcombine.low %v3173, %v3189
    %v3239 = vcombine.high %v3173, %v3189
    %v3241 = vunpack.c.l.s4 1934713408
    %v3242 = vunpack.c.0.s8 %v3241
    %v3243 = vlaneseq
    %v3244 = vshrl.u32 %v3243, 7
    %v3245 = vsub.s32 %v3242, %v3244
    %v3246 = vrot.slane %v3238, %v3245
    %v3248 = vunpack.c.l.s4 1934713408
    %v3249 = vunpack.c.0.s8 %v3248
    %v3250 = vlaneseq
    %v3251 = vshrl.u32 %v3250, 7
    %v3252 = vsub.s32 %v3249, %v3251
    %v3253 = vrot.slane %v3239, %v3252
    %v3254 = vcombine.low %v3198, %v3214
    %v3255 = vcombine.high %v3198, %v3214
    %v3257 = vunpack.c.l.s4 1934713408
    %v3258 = vunpack.c.0.s8 %v3257
    %v3259 = vlaneseq
    %v3260 = vshrl.u32 %v3259, 7
    %v3261 = vsub.s32 %v3258, %v3260
    %v3262 = vrot.slane %v3254, %v3261
    %v3264 = vunpack.c.l.s4 1934713408
    %v3265 = vunpack.c.0.s8 %v3264
    %v3266 = vlaneseq
    %v3267 = vshrl.u32 %v3266, 7
    %v3268 = vsub.s32 %v3265, %v3267
    %v3269 = vrot.slane %v3255, %v3268
    %v3270 = vcombine.low %v3205, %v3221
    %v3271 = vcombine.high %v3205, %v3221
    %v3273 = vunpack.c.l.s4 1934713408
    %v3274 = vunpack.c.0.s8 %v3273
    %v3275 = vlaneseq
    %v3276 = vshrl.u32 %v3275, 7
    %v3277 = vsub.s32 %v3274, %v3276
    %v3278 = vrot.slane %v3270, %v3277
    %v3280 = vunpack.c.l.s4 1934713408
    %v3281 = vunpack.c.0.s8 %v3280
    %v3282 = vlaneseq
    %v3283 = vshrl.u32 %v3282, 7
    %v3284 = vsub.s32 %v3281, %v3283
    %v3285 = vrot.slane %v3271, %v3284
    %v3286 = vcombine.low %v3230, %v3262
    %v3287 = vcombine.high %v3230, %v3262
    %v3288 = vcombine.low %v3237, %v3269
    %v3289 = vcombine.high %v3237, %v3269
    %v3290 = vcombine.low %v3246, %v3278
    %v3291 = vcombine.high %v3246, %v3278
    %v3292 = vcombine.low %v3253, %v3285
    %v3293 = vcombine.high %v3253, %v3285
    %v3294 = vcombine.low %v2878, %v2880
    %v3295 = vcombine.high %v2878, %v2880
    %v3297 = vunpack.c.l.s4 1983009808
    %v3298 = vunpack.c.0.s8 %v3297
    %v3299 = vlaneseq
    %v3300 = vshrl.u32 %v3299, 7
    %v3301 = vsub.s32 %v3298, %v3300
    %v3302 = vrot.slane %v3294, %v3301
    %v3304 = vunpack.c.l.s4 1983009808
    %v3305 = vunpack.c.0.s8 %v3304
    %v3306 = vlaneseq
    %v3307 = vshrl.u32 %v3306, 7
    %v3308 = vsub.s32 %v3305, %v3307
    %v3309 = vrot.slane %v3295, %v3308
    %v3310 = vcombine.low %v2879, %v2881
    %v3311 = vcombine.high %v2879, %v2881
    %v3313 = vunpack.c.l.s4 1983009808
    %v3314 = vunpack.c.0.s8 %v3313
    %v3315 = vlaneseq
    %v3316 = vshrl.u32 %v3315, 7
    %v3317 = vsub.s32 %v3314, %v3316
    %v3318 = vrot.slane %v3310, %v3317
    %v3320 = vunpack.c.l.s4 1983009808
    %v3321 = vunpack.c.0.s8 %v3320
    %v3322 = vlaneseq
    %v3323 = vshrl.u32 %v3322, 7
    %v3324 = vsub.s32 %v3321, %v3323
    %v3325 = vrot.slane %v3311, %v3324
    %v3326 = vcombine.low %v2882, %v2884
    %v3327 = vcombine.high %v2882, %v2884
    %v3329 = vunpack.c.l.s4 1983009808
    %v3330 = vunpack.c.0.s8 %v3329
    %v3331 = vlaneseq
    %v3332 = vshrl.u32 %v3331, 7
    %v3333 = vsub.s32 %v3330, %v3332
    %v3334 = vrot.slane %v3326, %v3333
    %v3336 = vunpack.c.l.s4 1983009808
    %v3337 = vunpack.c.0.s8 %v3336
    %v3338 = vlaneseq
    %v3339 = vshrl.u32 %v3338, 7
    %v3340 = vsub.s32 %v3337, %v3339
    %v3341 = vrot.slane %v3327, %v3340
    %v3342 = vcombine.low %v2883, %v2885
    %v3343 = vcombine.high %v2883, %v2885
    %v3345 = vunpack.c.l.s4 1983009808
    %v3346 = vunpack.c.0.s8 %v3345
    %v3347 = vlaneseq
    %v3348 = vshrl.u32 %v3347, 7
    %v3349 = vsub.s32 %v3346, %v3348
    %v3350 = vrot.slane %v3342, %v3349
    %v3352 = vunpack.c.l.s4 1983009808
    %v3353 = vunpack.c.0.s8 %v3352
    %v3354 = vlaneseq
    %v3355 = vshrl.u32 %v3354, 7
    %v3356 = vsub.s32 %v3353, %v3355
    %v3357 = vrot.slane %v3343, %v3356
    %v3358 = vcombine.low %v3302, %v3318
    %v3359 = vcombine.high %v3302, %v3318
    %v3361 = vunpack.c.l.s4 1934713408
    %v3362 = vunpack.c.0.s8 %v3361
    %v3363 = vlaneseq
    %v3364 = vshrl.u32 %v3363, 7
    %v3365 = vsub.s32 %v3362, %v3364
    %v3366 = vrot.slane %v3358, %v3365
    %v3368 = vunpack.c.l.s4 1934713408
    %v3369 = vunpack.c.0.s8 %v3368
    %v3370 = vlaneseq
    %v3371 = vshrl.u32 %v3370, 7
    %v3372 = vsub.s32 %v3369, %v3371
    %v3373 = vrot.slane %v3359, %v3372
    %v3374 = vcombine.low %v3309, %v3325
    %v3375 = vcombine.high %v3309, %v3325
    %v3377 = vunpack.c.l.s4 1934713408
    %v3378 = vunpack.c.0.s8 %v3377
    %v3379 = vlaneseq
    %v3380 = vshrl.u32 %v3379, 7
    %v3381 = vsub.s32 %v3378, %v3380
    %v3382 = vrot.slane %v3374, %v3381
    %v3384 = vunpack.c.l.s4 1934713408
    %v3385 = vunpack.c.0.s8 %v3384
    %v3386 = vlaneseq
    %v3387 = vshrl.u32 %v3386, 7
    %v3388 = vsub.s32 %v3385, %v3387
    %v3389 = vrot.slane %v3375, %v3388
    %v3390 = vcombine.low %v3334, %v3350
    %v3391 = vcombine.high %v3334, %v3350
    %v3393 = vunpack.c.l.s4 1934713408
    %v3394 = vunpack.c.0.s8 %v3393
    %v3395 = vlaneseq
    %v3396 = vshrl.u32 %v3395, 7
    %v3397 = vsub.s32 %v3394, %v3396
    %v3398 = vrot.slane %v3390, %v3397
    %v3400 = vunpack.c.l.s4 1934713408
    %v3401 = vunpack.c.0.s8 %v3400
    %v3402 = vlaneseq
    %v3403 = vshrl.u32 %v3402, 7
    %v3404 = vsub.s32 %v3401, %v3403
    %v3405 = vrot.slane %v3391, %v3404
    %v3406 = vcombine.low %v3341, %v3357
    %v3407 = vcombine.high %v3341, %v3357
    %v3409 = vunpack.c.l.s4 1934713408
    %v3410 = vunpack.c.0.s8 %v3409
    %v3411 = vlaneseq
    %v3412 = vshrl.u32 %v3411, 7
    %v3413 = vsub.s32 %v3410, %v3412
    %v3414 = vrot.slane %v3406, %v3413
    %v3416 = vunpack.c.l.s4 1934713408
    %v3417 = vunpack.c.0.s8 %v3416
    %v3418 = vlaneseq
    %v3419 = vshrl.u32 %v3418, 7
    %v3420 = vsub.s32 %v3417, %v3419
    %v3421 = vrot.slane %v3407, %v3420
    %v3422 = vcombine.low %v3366, %v3398
    %v3423 = vcombine.high %v3366, %v3398
    %v3424 = vcombine.low %v3373, %v3405
    %v3425 = vcombine.high %v3373, %v3405
    %v3426 = vcombine.low %v3382, %v3414
    %v3427 = vcombine.high %v3382, %v3414
    %v3428 = vcombine.low %v3389, %v3421
    %v3429 = vcombine.high %v3389, %v3421
    %3432 = vrot.lane.b32.xlu0 %v3015, 2
    %v3433 = vpop.permute.xlu0 %3432
    %3434 = vrot.lane.b32.xlu0 %v3287, 2
    %v3435 = vpop.permute.xlu0 %3434
    %3440 = vrot.lane.b32.xlu0 %v3016, 4
    %v3441 = vpop.permute.xlu0 %3440
    %3442 = vrot.lane.b32.xlu0 %v3288, 4
    %v3443 = vpop.permute.xlu0 %3442
    %3448 = vrot.lane.b32.xlu0 %v3017, 6
    %v3449 = vpop.permute.xlu0 %3448
    %3450 = vrot.lane.b32.xlu0 %v3289, 6
    %v3451 = vpop.permute.xlu0 %3450
    %3456 = vrot.lane.b32.xlu0 %v3018, 8
    %v3457 = vpop.permute.xlu0 %3456
    %3458 = vrot.lane.b32.xlu0 %v3290, 8
    %v3459 = vpop.permute.xlu0 %3458
    %3464 = vrot.lane.b32.xlu0 %v3019, 10
    %v3465 = vpop.permute.xlu0 %3464
    %3466 = vrot.lane.b32.xlu0 %v3291, 10
    %v3467 = vpop.permute.xlu0 %3466
    %3472 = vrot.lane.b32.xlu0 %v3020, 12
    %v3473 = vpop.permute.xlu0 %3472
    %3474 = vrot.lane.b32.xlu0 %v3292, 12
    %v3475 = vpop.permute.xlu0 %3474
    %3480 = vrot.lane.b32.xlu0 %v3021, 14
    %v3481 = vpop.permute.xlu0 %3480
    %3482 = vrot.lane.b32.xlu0 %v3293, 14
    %v3483 = vpop.permute.xlu0 %3482
    %3488 = vrot.lane.b32.xlu0 %v3150, 16
    %v3489 = vpop.permute.xlu0 %3488
    %3490 = vrot.lane.b32.xlu0 %v3422, 16
    %v3491 = vpop.permute.xlu0 %3490
    %3496 = vrot.lane.b32.xlu0 %v3151, 18
    %v3497 = vpop.permute.xlu0 %3496
    %3498 = vrot.lane.b32.xlu0 %v3423, 18
    %v3499 = vpop.permute.xlu0 %3498
    %3504 = vrot.lane.b32.xlu0 %v3152, 20
    %v3505 = vpop.permute.xlu0 %3504
    %3506 = vrot.lane.b32.xlu0 %v3424, 20
    %v3507 = vpop.permute.xlu0 %3506
    %3512 = vrot.lane.b32.xlu0 %v3153, 22
    %v3513 = vpop.permute.xlu0 %3512
    %3514 = vrot.lane.b32.xlu0 %v3425, 22
    %v3515 = vpop.permute.xlu0 %3514
    %3520 = vrot.lane.b32.xlu0 %v3154, 24
    %v3521 = vpop.permute.xlu0 %3520
    %3522 = vrot.lane.b32.xlu0 %v3426, 24
    %v3523 = vpop.permute.xlu0 %3522
    %3528 = vrot.lane.b32.xlu0 %v3155, 26
    %v3529 = vpop.permute.xlu0 %3528
    %3530 = vrot.lane.b32.xlu0 %v3427, 26
    %v3531 = vpop.permute.xlu0 %3530
    %3536 = vrot.lane.b32.xlu0 %v3156, 28
    %v3537 = vpop.permute.xlu0 %3536
    %3538 = vrot.lane.b32.xlu0 %v3428, 28
    %v3539 = vpop.permute.xlu0 %3538
    %3544 = vrot.lane.b32.xlu0 %v3157, 30
    %v3545 = vpop.permute.xlu0 %3544
    %3546 = vrot.lane.b32.xlu0 %v3429, 30
    %v3547 = vpop.permute.xlu0 %3546
    %vm3550 = vcmask 15360
    %v3551 = vsel %vm3550, %v3014, %v3433
    %v3552 = vsel %vm3550, %v3286, %v3435
    %v3553 = vsel %vm75, %v3551, %v3441
    %v3554 = vsel %vm75, %v3552, %v3443
    %vm3555 = vcmask 48128
    %v3556 = vsel %vm3555, %v3553, %v3449
    %v3557 = vsel %vm3555, %v3554, %v3451
    %vm3558 = vcmask 64512
    %v3559 = vsel %vm3558, %v3556, %v3457
    %v3560 = vsel %vm3558, %v3557, %v3459
    %vm3561 = vcmask 80896
    %v3562 = vsel %vm3561, %v3559, %v3465
    %v3563 = vsel %vm3561, %v3560, %v3467
    %vm3564 = vcmask 97280
    %v3565 = vsel %vm3564, %v3562, %v3473
    %v3566 = vsel %vm3564, %v3563, %v3475
    %vm3567 = vcmask 113664
    %v3568 = vsel %vm3567, %v3565, %v3481
    %v3569 = vsel %vm3567, %v3566, %v3483
    %v3570 = vsel %vm1161, %v3568, %v3489
    %v3571 = vsel %vm1161, %v3569, %v3491
    %vm3572 = vcmask 146432
    %v3573 = vsel %vm3572, %v3570, %v3497
    %v3574 = vsel %vm3572, %v3571, %v3499
    %vm3575 = vcmask 162816
    %v3576 = vsel %vm3575, %v3573, %v3505
    %v3577 = vsel %vm3575, %v3574, %v3507
    %vm3578 = vcmask 179200
    %v3579 = vsel %vm3578, %v3576, %v3513
    %v3580 = vsel %vm3578, %v3577, %v3515
    %vm3581 = vcmask 195584
    %v3582 = vsel %vm3581, %v3579, %v3521
    %v3583 = vsel %vm3581, %v3580, %v3523
    %vm3584 = vcmask 211968
    %v3585 = vsel %vm3584, %v3582, %v3529
    %v3586 = vsel %vm3584, %v3583, %v3531
    %vm3587 = vcmask 228352
    %v3588 = vsel %vm3587, %v3585, %v3537
    %v3589 = vsel %vm3587, %v3586, %v3539
    %vm3590 = vcmask 244736
    %v3591 = vsel %vm3590, %v3588, %v3545
    %v3592 = vsel %vm3590, %v3589, %v3547
    %v3593 = vld [vmem:[%s7] sm:$0xf]
    %v3595 = vsel %vm3558, %v3593, 0
    %3597 = vmatprep.subr.mxu0 0.0
    %3598 = vmatpush1.msra.mxu0 %v3591
    %3599 = vmatprep.subr.mxu0 0.0
    %3600 = vmatpush1.msra.mxu0 0.0
    %3601 = vmatprep.subr.mxu0 0.0
    %3602 = vmatpush1.msra.mxu0 0.0
    %3603 = vmatprep.subr.mxu0 0.0
    %3604 = vmatpush1.msra.mxu0 0.0
    %3605 = vmatprep.subr.mxu0 0.0
    %3606 = vmatpush1.msra.mxu0 0.0
    %3607 = vmatprep.subr.mxu0 0.0
    %3608 = vmatpush1.msra.mxu0 0.0
    %3609 = vmatprep.subr.mxu0 0.0
    %3610 = vmatpush1.msra.mxu0 0.0
    %3611 = vmatprep.subr.mxu0 0.0
    %3612 = vmatpush1.msra.mxu0 0.0
    %3613 = vmatprep.subr.mxu0 0.0
    %3614 = vmatpush1.msra.mxu0 0.0
    %3615 = vmatprep.subr.mxu0 0.0
    %3616 = vmatpush1.msra.mxu0 0.0
    %3617 = vmatprep.subr.mxu0 0.0
    %3618 = vmatpush1.msra.mxu0 0.0
    %3619 = vmatprep.subr.mxu0 0.0
    %3620 = vmatpush1.msra.mxu0 0.0
    %3621 = vmatprep.subr.mxu0 0.0
    %3622 = vmatpush1.msra.mxu0 0.0
    %3623 = vmatprep.subr.mxu0 0.0
    %3624 = vmatpush1.msra.mxu0 0.0
    %3625 = vmatprep.subr.mxu0 0.0
    %3626 = vmatpush1.msra.mxu0 0.0
    %3627 = vmatprep.subr.mxu0 0.0
    %3628 = vmatpush1.msra.mxu0 0.0
    %3629 = vmatprep.subr.mxu0 0.0
    %3630 = vmatpush1.msra.mxu0 0.0
    %3631 = vmatprep.subr.mxu0 0.0
    %3632 = vmatpush1.msra.mxu0 0.0
    %3633 = vmatprep.subr.mxu0 0.0
    %3634 = vmatpush1.msra.mxu0 0.0
    %3635 = vmatprep.subr.mxu0 0.0
    %3636 = vmatpush1.msra.mxu0 0.0
    %3637 = vmatprep.subr.mxu0 0.0
    %3638 = vmatpush1.msra.mxu0 0.0
    %3639 = vmatprep.subr.mxu0 0.0
    %3640 = vmatpush1.msra.mxu0 0.0
    %3641 = vmatprep.subr.mxu0 0.0
    %3642 = vmatpush1.msra.mxu0 0.0
    %3643 = vmatprep.subr.mxu0 0.0
    %3644 = vmatpush1.msra.mxu0 0.0
    %3645 = vmatprep.subr.mxu0 0.0
    %3646 = vmatpush1.msra.mxu0 0.0
    %3647 = vmatprep.subr.mxu0 0.0
    %3648 = vmatpush1.msra.mxu0 0.0
    %3649 = vmatprep.subr.mxu0 0.0
    %3650 = vmatpush1.msra.mxu0 0.0
    %3651 = vmatprep.subr.mxu0 0.0
    %3652 = vmatpush1.msra.mxu0 0.0
    %3653 = vmatprep.subr.mxu0 0.0
    %3654 = vmatpush1.msra.mxu0 0.0
    %3655 = vmatprep.subr.mxu0 0.0
    %3656 = vmatpush1.msra.mxu0 0.0
    %3657 = vmatprep.subr.mxu0 0.0
    %3658 = vmatpush1.msra.mxu0 0.0
    %3659 = vmatprep.subr.mxu0 0.0
    %3660 = vmatpush1.msra.mxu0 0.0
    %3661 = vmatprep.mubr.f32.mxu0 0.0
    %3662 = vmatmul.mubr.f32.gmra.mrb[0].mxu0 %v3595
    %v3663 = vpop.f32.mrb[0].mxu0
    %v3664 = vadd.f32 0.0, %v3663
    %v3665 = vpop.f32.mrb[0].mxu0
    %3666 = vdwg.mxu0
    %3667 = vmatprep.subr.mxu0 0.0
    %3668 = vmatpush1.msra.mxu0 %v3592
    %3669 = vmatprep.subr.mxu0 0.0
    %3670 = vmatpush1.msra.mxu0 0.0
    %3671 = vmatprep.subr.mxu0 0.0
    %3672 = vmatpush1.msra.mxu0 0.0
    %3673 = vmatprep.subr.mxu0 0.0
    %3674 = vmatpush1.msra.mxu0 0.0
    %3675 = vmatprep.subr.mxu0 0.0
    %3676 = vmatpush1.msra.mxu0 0.0
    %3677 = vmatprep.subr.mxu0 0.0
    %3678 = vmatpush1.msra.mxu0 0.0
    %3679 = vmatprep.subr.mxu0 0.0
    %3680 = vmatpush1.msra.mxu0 0.0
    %3681 = vmatprep.subr.mxu0 0.0
    %3682 = vmatpush1.msra.mxu0 0.0
    %3683 = vmatprep.subr.mxu0 0.0
    %3684 = vmatpush1.msra.mxu0 0.0
    %3685 = vmatprep.subr.mxu0 0.0
    %3686 = vmatpush1.msra.mxu0 0.0
    %3687 = vmatprep.subr.mxu0 0.0
    %3688 = vmatpush1.msra.mxu0 0.0
    %3689 = vmatprep.subr.mxu0 0.0
    %3690 = vmatpush1.msra.mxu0 0.0
    %3691 = vmatprep.subr.mxu0 0.0
    %3692 = vmatpush1.msra.mxu0 0.0
    %3693 = vmatprep.subr.mxu0 0.0
    %3694 = vmatpush1.msra.mxu0 0.0
    %3695 = vmatprep.subr.mxu0 0.0
    %3696 = vmatpush1.msra.mxu0 0.0
    %3697 = vmatprep.subr.mxu0 0.0
    %3698 = vmatpush1.msra.mxu0 0.0
    %3699 = vmatprep.subr.mxu0 0.0
    %3700 = vmatpush1.msra.mxu0 0.0
    %3701 = vmatprep.subr.mxu0 0.0
    %3702 = vmatpush1.msra.mxu0 0.0
    %3703 = vmatprep.subr.mxu0 0.0
    %3704 = vmatpush1.msra.mxu0 0.0
    %3705 = vmatprep.subr.mxu0 0.0
    %3706 = vmatpush1.msra.mxu0 0.0
    %3707 = vmatprep.subr.mxu0 0.0
    %3708 = vmatpush1.msra.mxu0 0.0
    %3709 = vmatprep.subr.mxu0 0.0
    %3710 = vmatpush1.msra.mxu0 0.0
    %3711 = vmatprep.subr.mxu0 0.0
    %3712 = vmatpush1.msra.mxu0 0.0
    %3713 = vmatprep.subr.mxu0 0.0
    %3714 = vmatpush1.msra.mxu0 0.0
    %3715 = vmatprep.subr.mxu0 0.0
    %3716 = vmatpush1.msra.mxu0 0.0
    %3717 = vmatprep.subr.mxu0 0.0
    %3718 = vmatpush1.msra.mxu0 0.0
    %3719 = vmatprep.subr.mxu0 0.0
    %3720 = vmatpush1.msra.mxu0 0.0
    %3721 = vmatprep.subr.mxu0 0.0
    %3722 = vmatpush1.msra.mxu0 0.0
    %3723 = vmatprep.subr.mxu0 0.0
    %3724 = vmatpush1.msra.mxu0 0.0
    %3725 = vmatprep.subr.mxu0 0.0
    %3726 = vmatpush1.msra.mxu0 0.0
    %3727 = vmatprep.subr.mxu0 0.0
    %3728 = vmatpush1.msra.mxu0 0.0
    %3729 = vmatprep.subr.mxu0 0.0
    %3730 = vmatpush1.msra.mxu0 0.0
    %3731 = vmatprep.mubr.f32.mxu0 0.0
    %3732 = vmatmul.mubr.f32.gmra.mrb[0].mxu0 %v3595
    %v3733 = vpop.f32.mrb[0].mxu0
    %v3734 = vadd.f32 0.0, %v3733
    %v3735 = vpop.f32.mrb[0].mxu0
    %3736 = vdwg.mxu0
    %v3738 = vunpack.c.l.s4 1983009808
    %v3739 = vunpack.c.0.s8 %v3738
    %v3740 = vlaneseq
    %v3741 = vshrl.u32 %v3740, 7
    %v3742 = vsub.s32 %v3739, %v3741
    %v3743 = vrot.slane %v3664, %v3742
    %v3745 = vunpack.c.l.s4 1983009808
    %v3746 = vunpack.c.0.s8 %v3745
    %v3747 = vlaneseq
    %v3748 = vshrl.u32 %v3747, 7
    %v3749 = vsub.s32 %v3746, %v3748
    %v3750 = vrot.slane %v3734, %v3749
    %v3751 = vcombine.low %v3743, %v3750
    %v3752 = vcombine.high %v3743, %v3750
    %v3754 = vunpack.c.l.s4 1934713408
    %v3755 = vunpack.c.0.s8 %v3754
    %v3756 = vlaneseq
    %v3757 = vshrl.u32 %v3756, 7
    %v3758 = vsub.s32 %v3755, %v3757
    %v3759 = vrot.slane %v3751, %v3758
    %v3761 = vunpack.c.l.s4 1934713408
    %v3762 = vunpack.c.0.s8 %v3761
    %v3763 = vlaneseq
    %v3764 = vshrl.u32 %v3763, 7
    %v3765 = vsub.s32 %v3762, %v3764
    %v3766 = vrot.slane %v3752, %v3765
    %v3767 = vcombine.high %v3759, 0.0
    %v3768 = vcombine.high %v3766, 0.0
    %3770 = vrot.lane.b32.xlu0 %v3767, 32
    %v3771 = vpop.permute.xlu0 %3770
    %3774 = vrot.lane.b32.xlu0 %v3766, 64
    %v3775 = vpop.permute.xlu0 %3774
    %3778 = vrot.lane.b32.xlu0 %v3768, 96
    %v3779 = vpop.permute.xlu0 %3778
    %v3781 = vsel %vm1048, %v3759, %v3771
    %v3782 = vsel %vm1051, %v3781, %v3775
    %v3783 = vsel %vm1054, %v3782, %v3779
    %v3784 = vld [vmem:[%s8] sm:$0x1]
    %v3786 = vlaneseq
    %v3787 = vshrl.u32 %v3786, 7
    %v3788 = vsub.s32 0, %v3787
    %v3789 = vrot.slane %v3784, %v3788
    %v3791 = vadd.f32 %v3783, %v3789
    %3792 = vst [vmem:[#allocation2] sm:$0x3] %v3791
    // Predicated region
    $region38: #{tpu_custom_call.1} parent=1 // pred_check
      _
    $region39: #{tpu_custom_call.1} parent=1 // pred_check_branch
      %3794 = sbr.rel (0) target = $region41
    $region40: #{tpu_custom_call.1} parent=1 // pred_region
      %s3796 = ssub.s32 32, 32
      %3797 = vsyncadd [#allocation3], %s3796
      %s3799 = sshll.u32 [#allocation2], 4
      %s3800 = int_to_ptr.vmem [resolvable:$true] %s3799
      %3802 = dma.vmem_to_hbm [thread:$0]  %s3800, 32, %s9, [#allocation3]
    $region41: #{tpu_custom_call.1} parent=1 // pred_fallthru
      _
    // Predicated region
    $region42: #{tpu_custom_call.1} parent=1 // pred_check
      _
    $region43: #{tpu_custom_call.1} parent=1 // pred_check_branch
      %3804 = sbr.rel (0) target = $region45
    $region44: #{tpu_custom_call.1} parent=1 // pred_region
      %3805 = dma.done [#allocation3], 32
    $region45: #{tpu_custom_call.1} parent=1 // pred_fallthru
      _
    %3806 = vsyncpa [#allocation3], 1

</llo_original>
